<compile_context>
chip_gen: v7x
topology: tpu7x:2x2x1
jax: 0.10.0
libtpu: 0.0.40
codegen_flags: <defaults>
</compile_context>

<pallas_src>
import jax
import jax.numpy as jnp
from jax.experimental import pallas as pl
from jax.experimental.pallas import tpu as pltpu

DIM = 128            # dimension_
IN_FEATURES = 2244   # fc0 input features (e.g. 4 x 561 UCI-HAR features)
K_PAD = 2304         # 18 * 128: zero-padded K for aligned lanes/sublanes
BN_EPS = 1e-5
VMEM_LIMIT = 32 * 1024 * 1024
VMEM_BUDGET = 24 * 1024 * 1024   # headroom under the scoped limit for tile choice


def _bn_train(h, gamma, beta):
    # nn.BatchNorm1d, training mode (module default): batch mean, biased batch var.
    mean = jnp.mean(h, axis=0, keepdims=True)
    var = jnp.mean(jnp.square(h - mean), axis=0, keepdims=True)
    return (h - mean) * jax.lax.rsqrt(var + BN_EPS) * gamma + beta


def net_kernel(x_ref, w0_ref, w1_ref, bn_ref, o_ref):
    k = pl.program_id(0)

    @pl.when(k == 0)
    def _():
        o_ref[...] = jnp.zeros_like(o_ref)

    # fc0 partial product for this K tile: single-pass bf16 MXU matmul with f32
    # accumulation directly into the VMEM-resident output block.
    o_ref[...] += jnp.dot(x_ref[...], w0_ref[...],
                          preferred_element_type=jnp.float32)

    @pl.when(k == pl.num_programs(0) - 1)
    def _():
        # Bias adds are dropped: per-feature bias before a training-mode BN
        # cancels exactly in (h - mean(h)).
        h = _bn_train(o_ref[...], bn_ref[0:1, :], bn_ref[1:2, :])
        # clamp(0,1) followed by floor  ==  (h >= 1 ? 1 : 0), fused to one select.
        h = jnp.where(h >= 1.0, 1.0, 0.0)

        # fc0_: h in {0,1} and w1 in {-1,0,1} are exact in bf16 -> single-pass
        # bf16 MXU matmul with f32 accumulation (exact result).
        h2 = jnp.dot(h.astype(jnp.bfloat16), w1_ref[...],
                     preferred_element_type=jnp.float32)
        h2 = _bn_train(h2, bn_ref[2:3, :], bn_ref[3:4, :])
        o_ref[...] = jnp.where(h2 >= 1.0, 1.0, 0.0)
        # fc1 is skipped because test_hdc=True in the reference module.


def quant_integer(w):
    # Quantization_integer_: ceil for w >= 0, floor for w < 0 (round away from 0).
    return jnp.where(w >= 0, jnp.ceil(w), jnp.floor(w))


def prepare_params(params):
    """One-time prep (hoisted out of the per-call path):
    quantize weights, transpose to (in, out), zero-pad K, cast to bf16
    (lossless for the small-integer quantized values), and pack the four
    per-feature BN vectors into a single (4, 128) operand.
    Biases are dropped: they cancel exactly under training-mode BatchNorm."""
    w0, b0, g0, be0, w1, b1, g1, be1 = params
    del b0, b1  # exact no-ops: cancel in (h - mean(h))
    w0q = quant_integer(w0.astype(jnp.float32)).T                   # (2244, 128)
    w0q = jnp.pad(w0q, ((0, K_PAD - IN_FEATURES), (0, 0)))          # (2304, 128)
    w1q = quant_integer(w1.astype(jnp.float32)).T                   # (128, 128)
    # Quantized values are small integers ({-1,0,1} for this init) -> bf16 exact.
    # (Keep bf16, not int8: the v7x MXU has no integer path.)
    # TODO(synk): on v7x an fp8(e4m3) w0 would halve the dominant DMA ({-1,0,1} is
    # exact in fp8) -- left as bf16 until the mixed-precision lowering is verified.
    w0q = w0q.astype(jnp.bfloat16)
    w1q = w1q.astype(jnp.bfloat16)
    bn = jnp.stack([g0, be0, g1, be1]).astype(jnp.float32)          # (4, 128)
    return (w0q, w1q, bn)


def _pick_k_tiling(B):
    """Prefer a single grid step (the kernel is launch/DMA-overhead bound at small B);
    fall back to K tiling only when double-buffered tiles would blow the VMEM budget."""
    for nk in (1, 2, 3, 6):
        tk = K_PAD // nk
        # x / w0 tiles are double-buffered by the pipeline; out + w1 + bn are resident.
        footprint = (2 * (B * tk * 2 + tk * DIM * 2)      # bf16 x-tile, w0-tile (x2 bufs)
                     + B * DIM * 4                        # f32 output accumulator
                     + DIM * DIM * 2 + 4 * DIM * 4)       # w1 + BN params
        if footprint <= VMEM_BUDGET:
            return nk, tk
    return 6, K_PAD // 6


def net_forward(x, prepped):
    """x: any (B, ...) array flattening to (B, 2244). Returns (B, 128) f32."""
    w0q, w1q, bn = prepped
    B = x.shape[0]
    x2 = x.reshape(B, -1)  # torch.flatten(x, 1)
    assert x2.shape[1] == IN_FEATURES, x2.shape
    # Cast to bf16 and zero-pad K in one fused XLA pass.  bf16 x matches the
    # effective precision of the previous f32 path (default matmul precision
    # truncates f32 MXU operands to bf16 passes) and halves the x DMA the kernel sees.
    x2 = jnp.pad(x2.astype(jnp.bfloat16), ((0, 0), (0, K_PAD - IN_FEATURES)))
    # TODO(synk): BatchNorm needs full-batch statistics, so the batch stays resident
    # in VMEM; very large B would need a two-pass (sum/sumsq) BN, a batch grid
    # (markable "parallel" for v7x's two cores), and the pad/cast moved in-kernel.

    nk, tk = _pick_k_tiling(B)

    cost = pl.CostEstimate(
        flops=2 * B * K_PAD * DIM + 2 * B * DIM * DIM,
        transcendentals=0,
        bytes_accessed=(B * K_PAD * 2 + K_PAD * DIM * 2
                        + DIM * DIM * 2 + 4 * DIM * 4 + B * DIM * 4),
    )

    return pl.pallas_call(
        net_kernel,
        out_shape=jax.ShapeDtypeStruct((B, DIM), jnp.float32),
        grid_spec=pltpu.PrefetchScalarGridSpec(
            num_scalar_prefetch=0,
            grid=(nk,),
            in_specs=[
                pl.BlockSpec((B, tk), lambda k: (0, k)),            # x K-tile (bf16)
                pl.BlockSpec((tk, DIM), lambda k: (k, 0)),          # w0 K-tile (bf16)
                pl.BlockSpec((DIM, DIM), lambda k: (0, 0)),         # w1 (VMEM-resident)
                pl.BlockSpec((4, DIM), lambda k: (0, 0)),           # BN params (resident)
            ],
            out_specs=pl.BlockSpec((B, DIM), lambda k: (0, 0)),     # resident accumulator
        ),
        compiler_params=pltpu.CompilerParams(
            dimension_semantics=("arbitrary",),   # K is a reduction axis
            vmem_limit_bytes=VMEM_LIMIT,
        ),
        cost_estimate=cost,
    )(x2, w0q, w1q, bn)


def init_params(key):
    """Deterministic synthetic params matching PyTorch nn.Linear / nn.BatchNorm1d init."""
    k0, kb0, k1, kb1 = jax.random.split(key, 4)
    bound0 = 1.0 / (IN_FEATURES ** 0.5)
    w0 = jax.random.uniform(k0, (DIM, IN_FEATURES), minval=-bound0, maxval=bound0,
                            dtype=jnp.float32)
    b0 = jax.random.uniform(kb0, (DIM,), minval=-bound0, maxval=bound0,
                            dtype=jnp.float32)
    bound1 = 1.0 / (DIM ** 0.5)
    w1 = jax.random.uniform(k1, (DIM, DIM), minval=-bound1, maxval=bound1,
                            dtype=jnp.float32)
    b1 = jax.random.uniform(kb1, (DIM,), minval=-bound1, maxval=bound1,
                            dtype=jnp.float32)
    # BatchNorm1d defaults: weight (gamma) = 1, bias (beta) = 0.
    g0 = jnp.ones((DIM,), jnp.float32)
    be0 = jnp.zeros((DIM,), jnp.float32)
    g1 = jnp.ones((DIM,), jnp.float32)
    be1 = jnp.zeros((DIM,), jnp.float32)
    return (w0, b0, g0, be0, w1, b1, g1, be1)


if __name__ == "__main__":
    key = jax.random.PRNGKey(0)
    kx, kp = jax.random.split(key)
    B = 8
    # Input shaped (B, 4, 561): flatten(x, 1) -> (B, 2244) as fc0 requires.
    x = jax.random.normal(kx, (B, 4, 561), dtype=jnp.float32)
    params = init_params(kp)
    prepped = prepare_params(params)   # one-time: quantize, transpose, pad, bf16

    out = net_forward(x, prepped)
    out = jax.block_until_ready(out)
    assert out.shape == (B, DIM), out.shape
    assert out.dtype == jnp.float32
    print("KERNEL_OK")
</pallas_src>

<mosaic_0001>
module attributes {stable_mosaic.version = 11 : i64} {
  func.func @net_kernel(%arg0: i32, %arg1: memref<8x2304xbf16, #tpu.memory_space<vmem>>, %arg2: memref<2304x128xbf16, #tpu.memory_space<vmem>>, %arg3: memref<128x128xbf16, #tpu.memory_space<vmem>>, %arg4: memref<4x128xf32, #tpu.memory_space<vmem>>, %arg5: memref<8x128xf32, #tpu.memory_space<vmem>>) attributes {dimension_semantics = [#tpu.dimension_semantics<arbitrary>], iteration_bounds = array<i64: 1>, scalar_prefetch = 0 : i64, scratch_operands = 0 : i64, tpu.core_type = #tpu.core_type<tc>, window_params = [{transform_indices = @transform_0, window_bounds = array<i64: 8, 2304>}, {transform_indices = @transform_1, window_bounds = array<i64: 2304, 128>}, {pipeline_mode = #tpu.pipeline_mode<synchronous>, transform_indices = @transform_2, window_bounds = array<i64: 128, 128>}, {pipeline_mode = #tpu.pipeline_mode<synchronous>, transform_indices = @transform_3, window_bounds = array<i64: 4, 128>}, {pipeline_mode = #tpu.pipeline_mode<synchronous>, transform_indices = @transform_4, window_bounds = array<i64: 8, 128>}]} {
    %c0_i32 = arith.constant 0 : i32
    %0 = arith.cmpi eq, %arg0, %c0_i32 : i32
    %1 = arith.extui %0 : i1 to i32
    %c0_i32_0 = arith.constant 0 : i32
    %2 = arith.cmpi ne, %1, %c0_i32_0 : i32
    scf.if %2 {
      %cst_10 = arith.constant 0.000000e+00 : f32
      %12 = vector.broadcast %cst_10 : f32 to vector<8x128xf32>
      %c0_11 = arith.constant 0 : index
      %c0_12 = arith.constant 0 : index
      %13 = vector.load %arg5[%c0_11, %c0_12] : memref<8x128xf32, #tpu.memory_space<vmem>>, vector<8x128xf32>
      tpu.vector_store %arg5[%c0_11, %c0_12], %12 {strides = array<i32>} : memref<8x128xf32, #tpu.memory_space<vmem>>, vector<8x128xf32>,
    } else {
    }
    %c0 = arith.constant 0 : index
    %c0_1 = arith.constant 0 : index
    %3 = vector.load %arg5[%c0, %c0_1] : memref<8x128xf32, #tpu.memory_space<vmem>>, vector<8x128xf32>
    %c0_2 = arith.constant 0 : index
    %c0_3 = arith.constant 0 : index
    %4 = vector.load %arg1[%c0_2, %c0_3] : memref<8x2304xbf16, #tpu.memory_space<vmem>>, vector<8x2304xbf16>
    %c0_4 = arith.constant 0 : index
    %c0_5 = arith.constant 0 : index
    %5 = vector.load %arg2[%c0_4, %c0_5] : memref<2304x128xbf16, #tpu.memory_space<vmem>>, vector<2304x128xbf16>
    %cst = arith.constant dense<0.000000e+00> : vector<8x128xf32>
    %6 = tpu.matmul %4, %5, %cst {dimension_numbers = #tpu.dot_dimension_numbers<[1], [0], [0], [1], [0, 0, 1, 1], [], []>} : vector<8x2304xbf16>, vector<2304x128xbf16>, vector<8x128xf32> -> vector<8x128xf32>
    %7 = arith.addf %3, %6 : vector<8x128xf32>
    %c0_6 = arith.constant 0 : index
    %c0_7 = arith.constant 0 : index
    %8 = vector.load %arg5[%c0_6, %c0_7] : memref<8x128xf32, #tpu.memory_space<vmem>>, vector<8x128xf32>
    tpu.vector_store %arg5[%c0_6, %c0_7], %7 {strides = array<i32>} : memref<8x128xf32, #tpu.memory_space<vmem>>, vector<8x128xf32>,
    %c0_i32_8 = arith.constant 0 : i32
    %9 = arith.cmpi eq, %arg0, %c0_i32_8 : i32
    %10 = arith.extui %9 : i1 to i32
    %c0_i32_9 = arith.constant 0 : i32
    %11 = arith.cmpi ne, %10, %c0_i32_9 : i32
    scf.if %11 {
      %c0_10 = arith.constant 0 : index
      %c0_11 = arith.constant 0 : index
      %12 = vector.load %arg5[%c0_10, %c0_11] : memref<8x128xf32, #tpu.memory_space<vmem>>, vector<8x128xf32>
      %c0_12 = arith.constant 0 : index
      %c0_13 = arith.constant 0 : index
      %13 = vector.load %arg4[%c0_12, %c0_13] : memref<4x128xf32, #tpu.memory_space<vmem>>, vector<1x128xf32>
      %c1 = arith.constant 1 : index
      %c0_14 = arith.constant 0 : index
      %14 = vector.load %arg4[%c1, %c0_14] : memref<4x128xf32, #tpu.memory_space<vmem>>, vector<1x128xf32>
      %cst_15 = arith.constant dense<0.000000e+00> : vector<128xf32>
      %15 = vector.multi_reduction <add>, %12, %cst_15 [0] : vector<8x128xf32> to vector<128xf32>
      %16 = vector.shape_cast %15 : vector<128xf32> to vector<1x128xf32>
      %cst_16 = arith.constant 8.000000e+00 : f32
      %17 = vector.broadcast %cst_16 : f32 to vector<1x128xf32>
      %18 = arith.divf %16, %17 : vector<1x128xf32>
      %19 = vector.broadcast %18 : vector<1x128xf32> to vector<8x128xf32>
      %20 = arith.subf %12, %19 : vector<8x128xf32>
      %21 = arith.mulf %20, %20 : vector<8x128xf32>
      %cst_17 = arith.constant dense<0.000000e+00> : vector<128xf32>
      %22 = vector.multi_reduction <add>, %21, %cst_17 [0] : vector<8x128xf32> to vector<128xf32>
      %23 = vector.shape_cast %22 : vector<128xf32> to vector<1x128xf32>
      %cst_18 = arith.constant 8.000000e+00 : f32
      %24 = vector.broadcast %cst_18 : f32 to vector<1x128xf32>
      %25 = arith.divf %23, %24 : vector<1x128xf32>
      %26 = vector.broadcast %18 : vector<1x128xf32> to vector<8x128xf32>
      %27 = arith.subf %12, %26 : vector<8x128xf32>
      %cst_19 = arith.constant 9.99999974E-6 : f32
      %28 = vector.broadcast %cst_19 : f32 to vector<1x128xf32>
      %29 = arith.addf %25, %28 : vector<1x128xf32>
      %30 = math.rsqrt %29 : vector<1x128xf32>
      %31 = vector.broadcast %30 : vector<1x128xf32> to vector<8x128xf32>
      %32 = arith.mulf %27, %31 : vector<8x128xf32>
      %33 = vector.broadcast %13 : vector<1x128xf32> to vector<8x128xf32>
      %34 = arith.mulf %32, %33 : vector<8x128xf32>
      %35 = vector.broadcast %14 : vector<1x128xf32> to vector<8x128xf32>
      %36 = arith.addf %34, %35 : vector<8x128xf32>
      %cst_20 = arith.constant 1.000000e+00 : f32
      %37 = vector.broadcast %cst_20 : f32 to vector<8x128xf32>
      %38 = arith.cmpf oge, %36, %37 : vector<8x128xf32>
      %cst_21 = arith.constant 1.000000e+00 : f32
      %cst_22 = arith.constant 0.000000e+00 : f32
      %39 = vector.broadcast %cst_21 : f32 to vector<8x128xf32>
      %40 = vector.broadcast %cst_22 : f32 to vector<8x128xf32>
      %41 = arith.select %38, %39, %40 : vector<8x128xi1>, vector<8x128xf32>
      %42 = arith.truncf %41 : vector<8x128xf32> to vector<8x128xbf16>
      %c0_23 = arith.constant 0 : index
      %c0_24 = arith.constant 0 : index
      %43 = vector.load %arg3[%c0_23, %c0_24] : memref<128x128xbf16, #tpu.memory_space<vmem>>, vector<128x128xbf16>
      %cst_25 = arith.constant dense<0.000000e+00> : vector<8x128xf32>
      %44 = tpu.matmul %42, %43, %cst_25 {dimension_numbers = #tpu.dot_dimension_numbers<[1], [0], [0], [1], [0, 0, 1, 1], [], []>} : vector<8x128xbf16>, vector<128x128xbf16>, vector<8x128xf32> -> vector<8x128xf32>
      %c2 = arith.constant 2 : index
      %c0_26 = arith.constant 0 : index
      %45 = vector.load %arg4[%c2, %c0_26] : memref<4x128xf32, #tpu.memory_space<vmem>>, vector<1x128xf32>
      %c3 = arith.constant 3 : index
      %c0_27 = arith.constant 0 : index
      %46 = vector.load %arg4[%c3, %c0_27] : memref<4x128xf32, #tpu.memory_space<vmem>>, vector<1x128xf32>
      %cst_28 = arith.constant dense<0.000000e+00> : vector<128xf32>
      %47 = vector.multi_reduction <add>, %44, %cst_28 [0] : vector<8x128xf32> to vector<128xf32>
      %48 = vector.shape_cast %47 : vector<128xf32> to vector<1x128xf32>
      %cst_29 = arith.constant 8.000000e+00 : f32
      %49 = vector.broadcast %cst_29 : f32 to vector<1x128xf32>
      %50 = arith.divf %48, %49 : vector<1x128xf32>
      %51 = vector.broadcast %50 : vector<1x128xf32> to vector<8x128xf32>
      %52 = arith.subf %44, %51 : vector<8x128xf32>
      %53 = arith.mulf %52, %52 : vector<8x128xf32>
      %cst_30 = arith.constant dense<0.000000e+00> : vector<128xf32>
      %54 = vector.multi_reduction <add>, %53, %cst_30 [0] : vector<8x128xf32> to vector<128xf32>
      %55 = vector.shape_cast %54 : vector<128xf32> to vector<1x128xf32>
      %cst_31 = arith.constant 8.000000e+00 : f32
      %56 = vector.broadcast %cst_31 : f32 to vector<1x128xf32>
      %57 = arith.divf %55, %56 : vector<1x128xf32>
      %58 = vector.broadcast %50 : vector<1x128xf32> to vector<8x128xf32>
      %59 = arith.subf %44, %58 : vector<8x128xf32>
      %cst_32 = arith.constant 9.99999974E-6 : f32
      %60 = vector.broadcast %cst_32 : f32 to vector<1x128xf32>
      %61 = arith.addf %57, %60 : vector<1x128xf32>
      %62 = math.rsqrt %61 : vector<1x128xf32>
      %63 = vector.broadcast %62 : vector<1x128xf32> to vector<8x128xf32>
      %64 = arith.mulf %59, %63 : vector<8x128xf32>
      %65 = vector.broadcast %45 : vector<1x128xf32> to vector<8x128xf32>
      %66 = arith.mulf %64, %65 : vector<8x128xf32>
      %67 = vector.broadcast %46 : vector<1x128xf32> to vector<8x128xf32>
      %68 = arith.addf %66, %67 : vector<8x128xf32>
      %cst_33 = arith.constant 1.000000e+00 : f32
      %69 = vector.broadcast %cst_33 : f32 to vector<8x128xf32>
      %70 = arith.cmpf oge, %68, %69 : vector<8x128xf32>
      %cst_34 = arith.constant 1.000000e+00 : f32
      %cst_35 = arith.constant 0.000000e+00 : f32
      %71 = vector.broadcast %cst_34 : f32 to vector<8x128xf32>
      %72 = vector.broadcast %cst_35 : f32 to vector<8x128xf32>
      %73 = arith.select %70, %71, %72 : vector<8x128xi1>, vector<8x128xf32>
      %c0_36 = arith.constant 0 : index
      %c0_37 = arith.constant 0 : index
      %74 = vector.load %arg5[%c0_36, %c0_37] : memref<8x128xf32, #tpu.memory_space<vmem>>, vector<8x128xf32>
      tpu.vector_store %arg5[%c0_36, %c0_37], %73 {strides = array<i32>} : memref<8x128xf32, #tpu.memory_space<vmem>>, vector<8x128xf32>,
    } else {
    }
    return
  }
  func.func @transform_0(%arg0: i32) -> (i32, i32) {
    %c0_i32 = arith.constant 0 : i32
    %c0_i32_0 = arith.constant 0 : i32
    return %c0_i32, %arg0 : i32, i32
  }
  func.func @transform_1(%arg0: i32) -> (i32, i32) {
    %c0_i32 = arith.constant 0 : i32
    %c0_i32_0 = arith.constant 0 : i32
    return %arg0, %c0_i32 : i32, i32
  }
  func.func @transform_2(%arg0: i32) -> (i32, i32) {
    %c0_i32 = arith.constant 0 : i32
    %c0_i32_0 = arith.constant 0 : i32
    %c0_i32_1 = arith.constant 0 : i32
    return %c0_i32, %c0_i32_0 : i32, i32
  }
  func.func @transform_3(%arg0: i32) -> (i32, i32) {
    %c0_i32 = arith.constant 0 : i32
    %c0_i32_0 = arith.constant 0 : i32
    %c0_i32_1 = arith.constant 0 : i32
    return %c0_i32, %c0_i32_0 : i32, i32
  }
  func.func @transform_4(%arg0: i32) -> (i32, i32) {
    %c0_i32 = arith.constant 0 : i32
    %c0_i32_0 = arith.constant 0 : i32
    %c0_i32_1 = arith.constant 0 : i32
    return %c0_i32, %c0_i32_0 : i32, i32
  }
}

</mosaic_0001>

<llo_original>
// kernel: tpu_custom_call.1
$region0: #{tpu_custom_call.1}
  #allocation0 [shape = 'u32[]', space=smem, size = 0x4, offset = 0x4, fixed_abs, tag = 'smem constant byte address 0x4 - core index']
  #allocation1 [shape = 'u32[144,128]{1,0:T(1,128)}', space=vmem, size = 0x12000, scoped, tag = 'internal scratch']
  %s0 = inlined_call_operand.hbm [shape: bf16[8,2304], index: 0, kind: input, shape index: {}]
  %s1 = inlined_call_operand.hbm [shape: bf16[2304,128], index: 1, kind: input, shape index: {}]
  %s2 = inlined_call_operand.hbm [shape: bf16[128,128], index: 2, kind: input, shape index: {}]
  %s3 = inlined_call_operand.vmem [shape: f32[4,128], index: 3, kind: input, shape index: {}]
  %s4 = inlined_call_operand.hbm [shape: f32[8,128], index: 4, kind: output, shape index: {}]
  %s5 = sld [smem:[#allocation0]]
  $region46: #{tpu_custom_call.1} parent=0
    _
  %s7 = ssub.s32 1, %s5
  %s8 = scalar_select 0, %s7, %s5
  $region1: #{tpu_custom_call.1} parent=0
    #allocation2 [shape = 'u8[36864]{0}', space=vmem, size = 0x9000, scoped, tag = 'input window, operand 0, single buffered']
    #allocation3 [shape = 's32[1]{0}', space=sflag, size = 0x4, scoped, tag = 'scoped memory for tpu_custom_call.1']
    #allocation4 [shape = 's32[1]{0}', space=sflag, size = 0x4, scoped, tag = 'scoped memory for tpu_custom_call.1']
    #allocation5 [shape = 'u8[589824]{0}', space=vmem, size = 0x90000, scoped, tag = 'input window, operand 1, single buffered']
    #allocation6 [shape = 's32[1]{0}', space=sflag, size = 0x4, scoped, tag = 'scoped memory for tpu_custom_call.1']
    #allocation7 [shape = 'u8[32768]{0}', space=vmem, size = 0x8000, scoped, tag = 'input window, operand 2, single buffered']
    #allocation8 [shape = 'u8[4096]{0}', space=vmem, size = 0x1000, scoped, tag = 'output window, operand 0, single buffered']
    %9 = vsyncpa [#allocation3], 0
    %10 = vsyncpa [#allocation6], 0
    %11 = vsyncpa [#allocation4], 0
    // Predicated region
    $region2: #{tpu_custom_call.1} parent=1 // pred_check
      _
    $region3: #{tpu_custom_call.1} parent=1 // pred_check_branch
      %13 = sbr.rel (0) target = $region5
    $region4: #{tpu_custom_call.1} parent=1 // pred_region
      %s15 = ssub.s32 1152, 1152
      %16 = vsyncadd [#allocation3], %s15
      %s18 = sshll.u32 [#allocation2], 4
      %s19 = int_to_ptr.vmem [resolvable:$true] %s18
      %21 = dma.hbm_to_vmem [thread:$0]  %s0, 1152, %s19, [#allocation3]
    $region5: #{tpu_custom_call.1} parent=1 // pred_fallthru
      _
    // Predicated region
    $region6: #{tpu_custom_call.1} parent=1 // pred_check
      _
    $region7: #{tpu_custom_call.1} parent=1 // pred_check_branch
      %23 = sbr.rel (0) target = $region9
    $region8: #{tpu_custom_call.1} parent=1 // pred_region
      %s25 = ssub.s32 18432, 18432
      %26 = vsyncadd [#allocation6], %s25
      %s27 = sshll.u32 [#allocation5], 4
      %s28 = int_to_ptr.vmem [resolvable:$true] %s27
      %33 = dma.hbm_to_vmem [thread:$0]  %s1, 18432, %s28, [#allocation6], 64, 64, 4
    $region9: #{tpu_custom_call.1} parent=1 // pred_fallthru
      _
    // Predicated region
    $region10: #{tpu_custom_call.1} parent=1 // pred_check
      _
    $region11: #{tpu_custom_call.1} parent=1 // pred_check_branch
      %35 = sbr.rel (0) target = $region13
    $region12: #{tpu_custom_call.1} parent=1 // pred_region
      %s37 = ssub.s32 1024, 1024
      %38 = vsyncadd [#allocation6], %s37
      %s39 = sshll.u32 [#allocation7], 4
      %s40 = int_to_ptr.vmem [resolvable:$true] %s39
      %45 = dma.hbm_to_vmem [thread:$0]  %s2, 1024, %s40, [#allocation6], 64, 64, 4
    $region13: #{tpu_custom_call.1} parent=1 // pred_fallthru
      _
    // Predicated region
    $region14: #{tpu_custom_call.1} parent=1 // pred_check
      _
    $region15: #{tpu_custom_call.1} parent=1 // pred_check_branch
      %47 = sbr.rel (0) target = $region17
    $region16: #{tpu_custom_call.1} parent=1 // pred_region
      _
    $region17: #{tpu_custom_call.1} parent=1 // pred_fallthru
      _
    // Predicated region
    $region18: #{tpu_custom_call.1} parent=1 // pred_check
      _
    $region19: #{tpu_custom_call.1} parent=1 // pred_check_branch
      %49 = sbr.rel (0) target = $region21
    $region20: #{tpu_custom_call.1} parent=1 // pred_region
      %50 = dma.done [#allocation3], 1152
    $region21: #{tpu_custom_call.1} parent=1 // pred_fallthru
      _
    // Predicated region
    $region22: #{tpu_custom_call.1} parent=1 // pred_check
      _
    $region23: #{tpu_custom_call.1} parent=1 // pred_check_branch
      %52 = sbr.rel (0) target = $region25
    $region24: #{tpu_custom_call.1} parent=1 // pred_region
      %53 = dma.done [#allocation6], 18432
    $region25: #{tpu_custom_call.1} parent=1 // pred_fallthru
      _
    // Predicated region
    $region26: #{tpu_custom_call.1} parent=1 // pred_check
      _
    $region27: #{tpu_custom_call.1} parent=1 // pred_check_branch
      %55 = sbr.rel (0) target = $region29
    $region28: #{tpu_custom_call.1} parent=1 // pred_region
      %56 = dma.done [#allocation6], 1024
    $region29: #{tpu_custom_call.1} parent=1 // pred_fallthru
      _
    %p58 = scmp.eq.s32.totalorder 0, 0
    // Predicated region
    $region30: #{tpu_custom_call.1} parent=1 // pred_check
      %p59 = pneg %p58
    $region31: #{tpu_custom_call.1} parent=1 // pred_check_branch
      %61 = sbr.rel (%p59) target = $region33
    $region32: #{tpu_custom_call.1} parent=1 // pred_region
      %62 = vst [vmem:[#allocation8] sm:$0xff] 0.0
    $region33: #{tpu_custom_call.1} parent=1 // pred_fallthru
      _
    %v63 = vld [vmem:[#allocation8] sm:$0xff]
    %v64 = vld [vmem:[#allocation2] sm:$0xff]
    %v65 = vld [vmem:[#allocation2 + $0x8] sm:$0xff]
    %v66 = vld [vmem:[#allocation2 + $0x10] sm:$0xff]
    %v67 = vld [vmem:[#allocation2 + $0x18] sm:$0xff]
    %v68 = vld [vmem:[#allocation2 + $0x20] sm:$0xff]
    %v69 = vld [vmem:[#allocation2 + $0x28] sm:$0xff]
    %v70 = vld [vmem:[#allocation2 + $0x30] sm:$0xff]
    %v71 = vld [vmem:[#allocation2 + $0x38] sm:$0xff]
    %v72 = vld [vmem:[#allocation2 + $0x40] sm:$0xff]
    %v73 = vld [vmem:[#allocation5] sm:$0xf]
    %v74 = vld [vmem:[#allocation5 + $0x4] sm:$0xf]
    %v75 = vld [vmem:[#allocation5 + $0x8] sm:$0xf]
    %v76 = vld [vmem:[#allocation5 + $0xc] sm:$0xf]
    %v77 = vld [vmem:[#allocation5 + $0x10] sm:$0xf]
    %v78 = vld [vmem:[#allocation5 + $0x14] sm:$0xf]
    %v79 = vld [vmem:[#allocation5 + $0x18] sm:$0xf]
    %v80 = vld [vmem:[#allocation5 + $0x1c] sm:$0xf]
    %v81 = vld [vmem:[#allocation5 + $0x20] sm:$0xf]
    %v82 = vld [vmem:[#allocation5 + $0x24] sm:$0xf]
    %v83 = vld [vmem:[#allocation5 + $0x28] sm:$0xf]
    %v84 = vld [vmem:[#allocation5 + $0x2c] sm:$0xf]
    %v85 = vld [vmem:[#allocation5 + $0x30] sm:$0xf]
    %v86 = vld [vmem:[#allocation5 + $0x34] sm:$0xf]
    %v87 = vld [vmem:[#allocation5 + $0x38] sm:$0xf]
    %v88 = vld [vmem:[#allocation5 + $0x3c] sm:$0xf]
    %v89 = vld [vmem:[#allocation5 + $0x40] sm:$0xf]
    %v90 = vld [vmem:[#allocation5 + $0x44] sm:$0xf]
    %v91 = vld [vmem:[#allocation5 + $0x48] sm:$0xf]
    %v92 = vld [vmem:[#allocation5 + $0x4c] sm:$0xf]
    %v93 = vld [vmem:[#allocation5 + $0x50] sm:$0xf]
    %v94 = vld [vmem:[#allocation5 + $0x54] sm:$0xf]
    %v95 = vld [vmem:[#allocation5 + $0x58] sm:$0xf]
    %v96 = vld [vmem:[#allocation5 + $0x5c] sm:$0xf]
    %v97 = vld [vmem:[#allocation5 + $0x60] sm:$0xf]
    %v98 = vld [vmem:[#allocation5 + $0x64] sm:$0xf]
    %v99 = vld [vmem:[#allocation5 + $0x68] sm:$0xf]
    %v100 = vld [vmem:[#allocation5 + $0x6c] sm:$0xf]
    %v101 = vld [vmem:[#allocation5 + $0x70] sm:$0xf]
    %v102 = vld [vmem:[#allocation5 + $0x74] sm:$0xf]
    %v103 = vld [vmem:[#allocation5 + $0x78] sm:$0xf]
    %v104 = vld [vmem:[#allocation5 + $0x7c] sm:$0xf]
    %v105 = vld [vmem:[#allocation5 + $0x80] sm:$0xf]
    %v106 = vld [vmem:[#allocation5 + $0x84] sm:$0xf]
    %v107 = vld [vmem:[#allocation5 + $0x88] sm:$0xf]
    %v108 = vld [vmem:[#allocation5 + $0x8c] sm:$0xf]
    %v109 = vld [vmem:[#allocation5 + $0x90] sm:$0xf]
    %v110 = vld [vmem:[#allocation5 + $0x94] sm:$0xf]
    %v111 = vld [vmem:[#allocation5 + $0x98] sm:$0xf]
    %v112 = vld [vmem:[#allocation5 + $0x9c] sm:$0xf]
    %v113 = vld [vmem:[#allocation5 + $0xa0] sm:$0xf]
    %v114 = vld [vmem:[#allocation5 + $0xa4] sm:$0xf]
    %v115 = vld [vmem:[#allocation5 + $0xa8] sm:$0xf]
    %v116 = vld [vmem:[#allocation5 + $0xac] sm:$0xf]
    %v117 = vld [vmem:[#allocation5 + $0xb0] sm:$0xf]
    %v118 = vld [vmem:[#allocation5 + $0xb4] sm:$0xf]
    %v119 = vld [vmem:[#allocation5 + $0xb8] sm:$0xf]
    %v120 = vld [vmem:[#allocation5 + $0xbc] sm:$0xf]
    %v121 = vld [vmem:[#allocation5 + $0xc0] sm:$0xf]
    %v122 = vld [vmem:[#allocation5 + $0xc4] sm:$0xf]
    %v123 = vld [vmem:[#allocation5 + $0xc8] sm:$0xf]
    %v124 = vld [vmem:[#allocation5 + $0xcc] sm:$0xf]
    %v125 = vld [vmem:[#allocation5 + $0xd0] sm:$0xf]
    %v126 = vld [vmem:[#allocation5 + $0xd4] sm:$0xf]
    %v127 = vld [vmem:[#allocation5 + $0xd8] sm:$0xf]
    %v128 = vld [vmem:[#allocation5 + $0xdc] sm:$0xf]
    %v129 = vld [vmem:[#allocation5 + $0xe0] sm:$0xf]
    %v130 = vld [vmem:[#allocation5 + $0xe4] sm:$0xf]
    %v131 = vld [vmem:[#allocation5 + $0xe8] sm:$0xf]
    %v132 = vld [vmem:[#allocation5 + $0xec] sm:$0xf]
    %v133 = vld [vmem:[#allocation5 + $0xf0] sm:$0xf]
    %v134 = vld [vmem:[#allocation5 + $0xf4] sm:$0xf]
    %v135 = vld [vmem:[#allocation5 + $0xf8] sm:$0xf]
    %v136 = vld [vmem:[#allocation5 + $0xfc] sm:$0xf]
    %v137 = vld [vmem:[#allocation5 + $0x100] sm:$0xf]
    %v138 = vld [vmem:[#allocation5 + $0x104] sm:$0xf]
    %v139 = vld [vmem:[#allocation5 + $0x108] sm:$0xf]
    %v140 = vld [vmem:[#allocation5 + $0x10c] sm:$0xf]
    %v141 = vld [vmem:[#allocation5 + $0x110] sm:$0xf]
    %v142 = vld [vmem:[#allocation5 + $0x114] sm:$0xf]
    %v143 = vld [vmem:[#allocation5 + $0x118] sm:$0xf]
    %v144 = vld [vmem:[#allocation5 + $0x11c] sm:$0xf]
    %v145 = vld [vmem:[#allocation5 + $0x120] sm:$0xf]
    %v146 = vld [vmem:[#allocation5 + $0x124] sm:$0xf]
    %v147 = vld [vmem:[#allocation5 + $0x128] sm:$0xf]
    %v148 = vld [vmem:[#allocation5 + $0x12c] sm:$0xf]
    %v149 = vld [vmem:[#allocation5 + $0x130] sm:$0xf]
    %v150 = vld [vmem:[#allocation5 + $0x134] sm:$0xf]
    %v151 = vld [vmem:[#allocation5 + $0x138] sm:$0xf]
    %v152 = vld [vmem:[#allocation5 + $0x13c] sm:$0xf]
    %v153 = vld [vmem:[#allocation5 + $0x140] sm:$0xf]
    %v154 = vld [vmem:[#allocation5 + $0x144] sm:$0xf]
    %v155 = vld [vmem:[#allocation5 + $0x148] sm:$0xf]
    %v156 = vld [vmem:[#allocation5 + $0x14c] sm:$0xf]
    %v157 = vld [vmem:[#allocation5 + $0x150] sm:$0xf]
    %v158 = vld [vmem:[#allocation5 + $0x154] sm:$0xf]
    %v159 = vld [vmem:[#allocation5 + $0x158] sm:$0xf]
    %v160 = vld [vmem:[#allocation5 + $0x15c] sm:$0xf]
    %v161 = vld [vmem:[#allocation5 + $0x160] sm:$0xf]
    %v162 = vld [vmem:[#allocation5 + $0x164] sm:$0xf]
    %v163 = vld [vmem:[#allocation5 + $0x168] sm:$0xf]
    %v164 = vld [vmem:[#allocation5 + $0x16c] sm:$0xf]
    %v165 = vld [vmem:[#allocation5 + $0x170] sm:$0xf]
    %v166 = vld [vmem:[#allocation5 + $0x174] sm:$0xf]
    %v167 = vld [vmem:[#allocation5 + $0x178] sm:$0xf]
    %v168 = vld [vmem:[#allocation5 + $0x17c] sm:$0xf]
    %v169 = vld [vmem:[#allocation5 + $0x180] sm:$0xf]
    %v170 = vld [vmem:[#allocation5 + $0x184] sm:$0xf]
    %v171 = vld [vmem:[#allocation5 + $0x188] sm:$0xf]
    %v172 = vld [vmem:[#allocation5 + $0x18c] sm:$0xf]
    %v173 = vld [vmem:[#allocation5 + $0x190] sm:$0xf]
    %v174 = vld [vmem:[#allocation5 + $0x194] sm:$0xf]
    %v175 = vld [vmem:[#allocation5 + $0x198] sm:$0xf]
    %v176 = vld [vmem:[#allocation5 + $0x19c] sm:$0xf]
    %v177 = vld [vmem:[#allocation5 + $0x1a0] sm:$0xf]
    %v178 = vld [vmem:[#allocation5 + $0x1a4] sm:$0xf]
    %v179 = vld [vmem:[#allocation5 + $0x1a8] sm:$0xf]
    %v180 = vld [vmem:[#allocation5 + $0x1ac] sm:$0xf]
    %v181 = vld [vmem:[#allocation5 + $0x1b0] sm:$0xf]
    %v182 = vld [vmem:[#allocation5 + $0x1b4] sm:$0xf]
    %v183 = vld [vmem:[#allocation5 + $0x1b8] sm:$0xf]
    %v184 = vld [vmem:[#allocation5 + $0x1bc] sm:$0xf]
    %v185 = vld [vmem:[#allocation5 + $0x1c0] sm:$0xf]
    %v186 = vld [vmem:[#allocation5 + $0x1c4] sm:$0xf]
    %v187 = vld [vmem:[#allocation5 + $0x1c8] sm:$0xf]
    %v188 = vld [vmem:[#allocation5 + $0x1cc] sm:$0xf]
    %v189 = vld [vmem:[#allocation5 + $0x1d0] sm:$0xf]
    %v190 = vld [vmem:[#allocation5 + $0x1d4] sm:$0xf]
    %v191 = vld [vmem:[#allocation5 + $0x1d8] sm:$0xf]
    %v192 = vld [vmem:[#allocation5 + $0x1dc] sm:$0xf]
    %v193 = vld [vmem:[#allocation5 + $0x1e0] sm:$0xf]
    %v194 = vld [vmem:[#allocation5 + $0x1e4] sm:$0xf]
    %v195 = vld [vmem:[#allocation5 + $0x1e8] sm:$0xf]
    %v196 = vld [vmem:[#allocation5 + $0x1ec] sm:$0xf]
    %v197 = vld [vmem:[#allocation5 + $0x1f0] sm:$0xf]
    %v198 = vld [vmem:[#allocation5 + $0x1f4] sm:$0xf]
    %v199 = vld [vmem:[#allocation5 + $0x1f8] sm:$0xf]
    %v200 = vld [vmem:[#allocation5 + $0x1fc] sm:$0xf]
    %v201 = vld [vmem:[#allocation5 + $0x200] sm:$0xf]
    %v202 = vld [vmem:[#allocation5 + $0x204] sm:$0xf]
    %v203 = vld [vmem:[#allocation5 + $0x208] sm:$0xf]
    %v204 = vld [vmem:[#allocation5 + $0x20c] sm:$0xf]
    %v205 = vld [vmem:[#allocation5 + $0x210] sm:$0xf]
    %v206 = vld [vmem:[#allocation5 + $0x214] sm:$0xf]
    %v207 = vld [vmem:[#allocation5 + $0x218] sm:$0xf]
    %v208 = vld [vmem:[#allocation5 + $0x21c] sm:$0xf]
    %v209 = vld [vmem:[#allocation5 + $0x220] sm:$0xf]
    %v210 = vld [vmem:[#allocation5 + $0x224] sm:$0xf]
    %v211 = vld [vmem:[#allocation5 + $0x228] sm:$0xf]
    %v212 = vld [vmem:[#allocation5 + $0x22c] sm:$0xf]
    %v213 = vld [vmem:[#allocation5 + $0x230] sm:$0xf]
    %v214 = vld [vmem:[#allocation5 + $0x234] sm:$0xf]
    %v215 = vld [vmem:[#allocation5 + $0x238] sm:$0xf]
    %v216 = vld [vmem:[#allocation5 + $0x23c] sm:$0xf]
    %v217 = vld [vmem:[#allocation5 + $0x240] sm:$0xf]
    %v218 = vld [vmem:[#allocation5 + $0x244] sm:$0xf]
    %v219 = vld [vmem:[#allocation5 + $0x248] sm:$0xf]
    %v220 = vld [vmem:[#allocation5 + $0x24c] sm:$0xf]
    %v221 = vld [vmem:[#allocation5 + $0x250] sm:$0xf]
    %v222 = vld [vmem:[#allocation5 + $0x254] sm:$0xf]
    %v223 = vld [vmem:[#allocation5 + $0x258] sm:$0xf]
    %v224 = vld [vmem:[#allocation5 + $0x25c] sm:$0xf]
    %v225 = vld [vmem:[#allocation5 + $0x260] sm:$0xf]
    %v226 = vld [vmem:[#allocation5 + $0x264] sm:$0xf]
    %v227 = vld [vmem:[#allocation5 + $0x268] sm:$0xf]
    %v228 = vld [vmem:[#allocation5 + $0x26c] sm:$0xf]
    %v229 = vld [vmem:[#allocation5 + $0x270] sm:$0xf]
    %v230 = vld [vmem:[#allocation5 + $0x274] sm:$0xf]
    %v231 = vld [vmem:[#allocation5 + $0x278] sm:$0xf]
    %v232 = vld [vmem:[#allocation5 + $0x27c] sm:$0xf]
    %v233 = vld [vmem:[#allocation5 + $0x280] sm:$0xf]
    %v234 = vld [vmem:[#allocation5 + $0x284] sm:$0xf]
    %v235 = vld [vmem:[#allocation5 + $0x288] sm:$0xf]
    %v236 = vld [vmem:[#allocation5 + $0x28c] sm:$0xf]
    %v237 = vld [vmem:[#allocation5 + $0x290] sm:$0xf]
    %v238 = vld [vmem:[#allocation5 + $0x294] sm:$0xf]
    %v239 = vld [vmem:[#allocation5 + $0x298] sm:$0xf]
    %v240 = vld [vmem:[#allocation5 + $0x29c] sm:$0xf]
    %v241 = vld [vmem:[#allocation5 + $0x2a0] sm:$0xf]
    %v242 = vld [vmem:[#allocation5 + $0x2a4] sm:$0xf]
    %v243 = vld [vmem:[#allocation5 + $0x2a8] sm:$0xf]
    %v244 = vld [vmem:[#allocation5 + $0x2ac] sm:$0xf]
    %v245 = vld [vmem:[#allocation5 + $0x2b0] sm:$0xf]
    %v246 = vld [vmem:[#allocation5 + $0x2b4] sm:$0xf]
    %v247 = vld [vmem:[#allocation5 + $0x2b8] sm:$0xf]
    %v248 = vld [vmem:[#allocation5 + $0x2bc] sm:$0xf]
    %v249 = vld [vmem:[#allocation5 + $0x2c0] sm:$0xf]
    %v250 = vld [vmem:[#allocation5 + $0x2c4] sm:$0xf]
    %v251 = vld [vmem:[#allocation5 + $0x2c8] sm:$0xf]
    %v252 = vld [vmem:[#allocation5 + $0x2cc] sm:$0xf]
    %v253 = vld [vmem:[#allocation5 + $0x2d0] sm:$0xf]
    %v254 = vld [vmem:[#allocation5 + $0x2d4] sm:$0xf]
    %v255 = vld [vmem:[#allocation5 + $0x2d8] sm:$0xf]
    %v256 = vld [vmem:[#allocation5 + $0x2dc] sm:$0xf]
    %v257 = vld [vmem:[#allocation5 + $0x2e0] sm:$0xf]
    %v258 = vld [vmem:[#allocation5 + $0x2e4] sm:$0xf]
    %v259 = vld [vmem:[#allocation5 + $0x2e8] sm:$0xf]
    %v260 = vld [vmem:[#allocation5 + $0x2ec] sm:$0xf]
    %v261 = vld [vmem:[#allocation5 + $0x2f0] sm:$0xf]
    %v262 = vld [vmem:[#allocation5 + $0x2f4] sm:$0xf]
    %v263 = vld [vmem:[#allocation5 + $0x2f8] sm:$0xf]
    %v264 = vld [vmem:[#allocation5 + $0x2fc] sm:$0xf]
    %v265 = vld [vmem:[#allocation5 + $0x300] sm:$0xf]
    %v266 = vld [vmem:[#allocation5 + $0x304] sm:$0xf]
    %v267 = vld [vmem:[#allocation5 + $0x308] sm:$0xf]
    %v268 = vld [vmem:[#allocation5 + $0x30c] sm:$0xf]
    %v269 = vld [vmem:[#allocation5 + $0x310] sm:$0xf]
    %v270 = vld [vmem:[#allocation5 + $0x314] sm:$0xf]
    %v271 = vld [vmem:[#allocation5 + $0x318] sm:$0xf]
    %v272 = vld [vmem:[#allocation5 + $0x31c] sm:$0xf]
    %v273 = vld [vmem:[#allocation5 + $0x320] sm:$0xf]
    %v274 = vld [vmem:[#allocation5 + $0x324] sm:$0xf]
    %v275 = vld [vmem:[#allocation5 + $0x328] sm:$0xf]
    %v276 = vld [vmem:[#allocation5 + $0x32c] sm:$0xf]
    %v277 = vld [vmem:[#allocation5 + $0x330] sm:$0xf]
    %v278 = vld [vmem:[#allocation5 + $0x334] sm:$0xf]
    %v279 = vld [vmem:[#allocation5 + $0x338] sm:$0xf]
    %v280 = vld [vmem:[#allocation5 + $0x33c] sm:$0xf]
    %v281 = vld [vmem:[#allocation5 + $0x340] sm:$0xf]
    %v282 = vld [vmem:[#allocation5 + $0x344] sm:$0xf]
    %v283 = vld [vmem:[#allocation5 + $0x348] sm:$0xf]
    %v284 = vld [vmem:[#allocation5 + $0x34c] sm:$0xf]
    %v285 = vld [vmem:[#allocation5 + $0x350] sm:$0xf]
    %v286 = vld [vmem:[#allocation5 + $0x354] sm:$0xf]
    %v287 = vld [vmem:[#allocation5 + $0x358] sm:$0xf]
    %v288 = vld [vmem:[#allocation5 + $0x35c] sm:$0xf]
    %v289 = vld [vmem:[#allocation5 + $0x360] sm:$0xf]
    %v290 = vld [vmem:[#allocation5 + $0x364] sm:$0xf]
    %v291 = vld [vmem:[#allocation5 + $0x368] sm:$0xf]
    %v292 = vld [vmem:[#allocation5 + $0x36c] sm:$0xf]
    %v293 = vld [vmem:[#allocation5 + $0x370] sm:$0xf]
    %v294 = vld [vmem:[#allocation5 + $0x374] sm:$0xf]
    %v295 = vld [vmem:[#allocation5 + $0x378] sm:$0xf]
    %v296 = vld [vmem:[#allocation5 + $0x37c] sm:$0xf]
    %v297 = vld [vmem:[#allocation5 + $0x380] sm:$0xf]
    %v298 = vld [vmem:[#allocation5 + $0x384] sm:$0xf]
    %v299 = vld [vmem:[#allocation5 + $0x388] sm:$0xf]
    %v300 = vld [vmem:[#allocation5 + $0x38c] sm:$0xf]
    %v301 = vld [vmem:[#allocation5 + $0x390] sm:$0xf]
    %v302 = vld [vmem:[#allocation5 + $0x394] sm:$0xf]
    %v303 = vld [vmem:[#allocation5 + $0x398] sm:$0xf]
    %v304 = vld [vmem:[#allocation5 + $0x39c] sm:$0xf]
    %v305 = vld [vmem:[#allocation5 + $0x3a0] sm:$0xf]
    %v306 = vld [vmem:[#allocation5 + $0x3a4] sm:$0xf]
    %v307 = vld [vmem:[#allocation5 + $0x3a8] sm:$0xf]
    %v308 = vld [vmem:[#allocation5 + $0x3ac] sm:$0xf]
    %v309 = vld [vmem:[#allocation5 + $0x3b0] sm:$0xf]
    %v310 = vld [vmem:[#allocation5 + $0x3b4] sm:$0xf]
    %v311 = vld [vmem:[#allocation5 + $0x3b8] sm:$0xf]
    %v312 = vld [vmem:[#allocation5 + $0x3bc] sm:$0xf]
    %v313 = vld [vmem:[#allocation5 + $0x3c0] sm:$0xf]
    %v314 = vld [vmem:[#allocation5 + $0x3c4] sm:$0xf]
    %v315 = vld [vmem:[#allocation5 + $0x3c8] sm:$0xf]
    %v316 = vld [vmem:[#allocation5 + $0x3cc] sm:$0xf]
    %v317 = vld [vmem:[#allocation5 + $0x3d0] sm:$0xf]
    %v318 = vld [vmem:[#allocation5 + $0x3d4] sm:$0xf]
    %v319 = vld [vmem:[#allocation5 + $0x3d8] sm:$0xf]
    %v320 = vld [vmem:[#allocation5 + $0x3dc] sm:$0xf]
    %v321 = vld [vmem:[#allocation5 + $0x3e0] sm:$0xf]
    %v322 = vld [vmem:[#allocation5 + $0x3e4] sm:$0xf]
    %v323 = vld [vmem:[#allocation5 + $0x3e8] sm:$0xf]
    %v324 = vld [vmem:[#allocation5 + $0x3ec] sm:$0xf]
    %v325 = vld [vmem:[#allocation5 + $0x3f0] sm:$0xf]
    %v326 = vld [vmem:[#allocation5 + $0x3f4] sm:$0xf]
    %v327 = vld [vmem:[#allocation5 + $0x3f8] sm:$0xf]
    %v328 = vld [vmem:[#allocation5 + $0x3fc] sm:$0xf]
    %v329 = vld [vmem:[#allocation5 + $0x400] sm:$0xf]
    %v330 = vld [vmem:[#allocation5 + $0x404] sm:$0xf]
    %v331 = vld [vmem:[#allocation5 + $0x408] sm:$0xf]
    %v332 = vld [vmem:[#allocation5 + $0x40c] sm:$0xf]
    %v333 = vld [vmem:[#allocation5 + $0x410] sm:$0xf]
    %v334 = vld [vmem:[#allocation5 + $0x414] sm:$0xf]
    %v335 = vld [vmem:[#allocation5 + $0x418] sm:$0xf]
    %v336 = vld [vmem:[#allocation5 + $0x41c] sm:$0xf]
    %v337 = vld [vmem:[#allocation5 + $0x420] sm:$0xf]
    %v338 = vld [vmem:[#allocation5 + $0x424] sm:$0xf]
    %v339 = vld [vmem:[#allocation5 + $0x428] sm:$0xf]
    %v340 = vld [vmem:[#allocation5 + $0x42c] sm:$0xf]
    %v341 = vld [vmem:[#allocation5 + $0x430] sm:$0xf]
    %v342 = vld [vmem:[#allocation5 + $0x434] sm:$0xf]
    %v343 = vld [vmem:[#allocation5 + $0x438] sm:$0xf]
    %v344 = vld [vmem:[#allocation5 + $0x43c] sm:$0xf]
    %v345 = vld [vmem:[#allocation5 + $0x440] sm:$0xf]
    %v346 = vld [vmem:[#allocation5 + $0x444] sm:$0xf]
    %v347 = vld [vmem:[#allocation5 + $0x448] sm:$0xf]
    %v348 = vld [vmem:[#allocation5 + $0x44c] sm:$0xf]
    %v349 = vld [vmem:[#allocation5 + $0x450] sm:$0xf]
    %v350 = vld [vmem:[#allocation5 + $0x454] sm:$0xf]
    %v351 = vld [vmem:[#allocation5 + $0x458] sm:$0xf]
    %v352 = vld [vmem:[#allocation5 + $0x45c] sm:$0xf]
    %v353 = vld [vmem:[#allocation5 + $0x460] sm:$0xf]
    %v354 = vld [vmem:[#allocation5 + $0x464] sm:$0xf]
    %v355 = vld [vmem:[#allocation5 + $0x468] sm:$0xf]
    %v356 = vld [vmem:[#allocation5 + $0x46c] sm:$0xf]
    %v357 = vld [vmem:[#allocation5 + $0x470] sm:$0xf]
    %v358 = vld [vmem:[#allocation5 + $0x474] sm:$0xf]
    %v359 = vld [vmem:[#allocation5 + $0x478] sm:$0xf]
    %v360 = vld [vmem:[#allocation5 + $0x47c] sm:$0xf]
    %v370 = vunpack.c.l.b16 %v64
    %v371 = vunpack.c.h.b16 %v64
    %v372 = vunpack.c.l.b16 %v65
    %v373 = vunpack.c.h.b16 %v65
    %v374 = vunpack.c.l.b16 %v66
    %v375 = vunpack.c.h.b16 %v66
    %v376 = vunpack.c.l.b16 %v67
    %v377 = vunpack.c.h.b16 %v67
    %v378 = vunpack.c.l.b16 %v68
    %v379 = vunpack.c.h.b16 %v68
    %v380 = vunpack.c.l.b16 %v69
    %v381 = vunpack.c.h.b16 %v69
    %v382 = vunpack.c.l.b16 %v70
    %v383 = vunpack.c.h.b16 %v70
    %v384 = vunpack.c.l.b16 %v71
    %v385 = vunpack.c.h.b16 %v71
    %v386 = vunpack.c.l.b16 %v72
    %v387 = vunpack.c.h.b16 %v72
    %v388 = vpack.c.b16 %v370, %v370
    %v389 = vpack.c.b16 %v371, %v371
    %v390 = vpack.c.b16 %v372, %v372
    %v391 = vpack.c.b16 %v373, %v373
    %v392 = vpack.c.b16 %v374, %v374
    %v393 = vpack.c.b16 %v375, %v375
    %v394 = vpack.c.b16 %v376, %v376
    %v395 = vpack.c.b16 %v377, %v377
    %v396 = vpack.c.b16 %v378, %v378
    %v397 = vpack.c.b16 %v379, %v379
    %v398 = vpack.c.b16 %v380, %v380
    %v399 = vpack.c.b16 %v381, %v381
    %v400 = vpack.c.b16 %v382, %v382
    %v401 = vpack.c.b16 %v383, %v383
    %v402 = vpack.c.b16 %v384, %v384
    %v403 = vpack.c.b16 %v385, %v385
    %v404 = vpack.c.b16 %v386, %v386
    %v405 = vpack.c.b16 %v387, %v387
    %v712 = vunpack.c.l.b16 %v73
    %v713 = vunpack.c.l.b16 %v74
    %v714 = vunpack.c.l.b16 %v75
    %v715 = vunpack.c.l.b16 %v76
    %v716 = vunpack.c.l.b16 %v77
    %v717 = vunpack.c.l.b16 %v78
    %v718 = vunpack.c.l.b16 %v79
    %v719 = vunpack.c.l.b16 %v80
    %v720 = vunpack.c.l.b16 %v81
    %v721 = vunpack.c.l.b16 %v82
    %v722 = vunpack.c.l.b16 %v83
    %v723 = vunpack.c.l.b16 %v84
    %v724 = vunpack.c.l.b16 %v85
    %v725 = vunpack.c.l.b16 %v86
    %v726 = vunpack.c.l.b16 %v87
    %v727 = vunpack.c.l.b16 %v88
    %v728 = vunpack.c.l.b16 %v89
    %v729 = vunpack.c.l.b16 %v90
    %v730 = vunpack.c.l.b16 %v91
    %v731 = vunpack.c.l.b16 %v92
    %v732 = vunpack.c.l.b16 %v93
    %v733 = vunpack.c.l.b16 %v94
    %v734 = vunpack.c.l.b16 %v95
    %v735 = vunpack.c.l.b16 %v96
    %v736 = vunpack.c.l.b16 %v97
    %v737 = vunpack.c.l.b16 %v98
    %v738 = vunpack.c.l.b16 %v99
    %v739 = vunpack.c.l.b16 %v100
    %v740 = vunpack.c.l.b16 %v101
    %v741 = vunpack.c.l.b16 %v102
    %v742 = vunpack.c.l.b16 %v103
    %v743 = vunpack.c.l.b16 %v104
    %v744 = vunpack.c.l.b16 %v105
    %v745 = vunpack.c.l.b16 %v106
    %v746 = vunpack.c.l.b16 %v107
    %v747 = vunpack.c.l.b16 %v108
    %v748 = vunpack.c.l.b16 %v109
    %v749 = vunpack.c.l.b16 %v110
    %v750 = vunpack.c.l.b16 %v111
    %v751 = vunpack.c.l.b16 %v112
    %v752 = vunpack.c.l.b16 %v113
    %v753 = vunpack.c.l.b16 %v114
    %v754 = vunpack.c.l.b16 %v115
    %v755 = vunpack.c.l.b16 %v116
    %v756 = vunpack.c.l.b16 %v117
    %v757 = vunpack.c.l.b16 %v118
    %v758 = vunpack.c.l.b16 %v119
    %v759 = vunpack.c.l.b16 %v120
    %v760 = vunpack.c.l.b16 %v121
    %v761 = vunpack.c.l.b16 %v122
    %v762 = vunpack.c.l.b16 %v123
    %v763 = vunpack.c.l.b16 %v124
    %v764 = vunpack.c.l.b16 %v125
    %v765 = vunpack.c.l.b16 %v126
    %v766 = vunpack.c.l.b16 %v127
    %v767 = vunpack.c.l.b16 %v128
    %v768 = vunpack.c.l.b16 %v129
    %v769 = vunpack.c.l.b16 %v130
    %v770 = vunpack.c.l.b16 %v131
    %v771 = vunpack.c.l.b16 %v132
    %v772 = vunpack.c.l.b16 %v133
    %v773 = vunpack.c.l.b16 %v134
    %v774 = vunpack.c.l.b16 %v135
    %v775 = vunpack.c.l.b16 %v136
    %v776 = vunpack.c.l.b16 %v137
    %v777 = vunpack.c.l.b16 %v138
    %v778 = vunpack.c.l.b16 %v139
    %v779 = vunpack.c.l.b16 %v140
    %v780 = vunpack.c.l.b16 %v141
    %v781 = vunpack.c.l.b16 %v142
    %v782 = vunpack.c.l.b16 %v143
    %v783 = vunpack.c.l.b16 %v144
    %v784 = vunpack.c.l.b16 %v145
    %v785 = vunpack.c.l.b16 %v146
    %v786 = vunpack.c.l.b16 %v147
    %v787 = vunpack.c.l.b16 %v148
    %v788 = vunpack.c.l.b16 %v149
    %v789 = vunpack.c.l.b16 %v150
    %v790 = vunpack.c.l.b16 %v151
    %v791 = vunpack.c.l.b16 %v152
    %v792 = vunpack.c.l.b16 %v153
    %v793 = vunpack.c.l.b16 %v154
    %v794 = vunpack.c.l.b16 %v155
    %v795 = vunpack.c.l.b16 %v156
    %v796 = vunpack.c.l.b16 %v157
    %v797 = vunpack.c.l.b16 %v158
    %v798 = vunpack.c.l.b16 %v159
    %v799 = vunpack.c.l.b16 %v160
    %v800 = vunpack.c.l.b16 %v161
    %v801 = vunpack.c.l.b16 %v162
    %v802 = vunpack.c.l.b16 %v163
    %v803 = vunpack.c.l.b16 %v164
    %v804 = vunpack.c.l.b16 %v165
    %v805 = vunpack.c.l.b16 %v166
    %v806 = vunpack.c.l.b16 %v167
    %v807 = vunpack.c.l.b16 %v168
    %v808 = vunpack.c.l.b16 %v169
    %v809 = vunpack.c.l.b16 %v170
    %v810 = vunpack.c.l.b16 %v171
    %v811 = vunpack.c.l.b16 %v172
    %v812 = vunpack.c.l.b16 %v173
    %v813 = vunpack.c.l.b16 %v174
    %v814 = vunpack.c.l.b16 %v175
    %v815 = vunpack.c.l.b16 %v176
    %v816 = vunpack.c.l.b16 %v177
    %v817 = vunpack.c.l.b16 %v178
    %v818 = vunpack.c.l.b16 %v179
    %v819 = vunpack.c.l.b16 %v180
    %v820 = vunpack.c.l.b16 %v181
    %v821 = vunpack.c.l.b16 %v182
    %v822 = vunpack.c.l.b16 %v183
    %v823 = vunpack.c.l.b16 %v184
    %v824 = vunpack.c.l.b16 %v185
    %v825 = vunpack.c.l.b16 %v186
    %v826 = vunpack.c.l.b16 %v187
    %v827 = vunpack.c.l.b16 %v188
    %v828 = vunpack.c.l.b16 %v189
    %v829 = vunpack.c.l.b16 %v190
    %v830 = vunpack.c.l.b16 %v191
    %v831 = vunpack.c.l.b16 %v192
    %v832 = vunpack.c.l.b16 %v193
    %v833 = vunpack.c.l.b16 %v194
    %v834 = vunpack.c.l.b16 %v195
    %v835 = vunpack.c.l.b16 %v196
    %v836 = vunpack.c.l.b16 %v197
    %v837 = vunpack.c.l.b16 %v198
    %v838 = vunpack.c.l.b16 %v199
    %v839 = vunpack.c.l.b16 %v200
    %v840 = vunpack.c.l.b16 %v201
    %v841 = vunpack.c.l.b16 %v202
    %v842 = vunpack.c.l.b16 %v203
    %v843 = vunpack.c.l.b16 %v204
    %v844 = vunpack.c.l.b16 %v205
    %v845 = vunpack.c.l.b16 %v206
    %v846 = vunpack.c.l.b16 %v207
    %v847 = vunpack.c.l.b16 %v208
    %v848 = vunpack.c.l.b16 %v209
    %v849 = vunpack.c.l.b16 %v210
    %v850 = vunpack.c.l.b16 %v211
    %v851 = vunpack.c.l.b16 %v212
    %v852 = vunpack.c.l.b16 %v213
    %v853 = vunpack.c.l.b16 %v214
    %v854 = vunpack.c.l.b16 %v215
    %v855 = vunpack.c.l.b16 %v216
    %v856 = vunpack.c.l.b16 %v217
    %v857 = vunpack.c.l.b16 %v218
    %v858 = vunpack.c.l.b16 %v219
    %v859 = vunpack.c.l.b16 %v220
    %v860 = vunpack.c.l.b16 %v221
    %v861 = vunpack.c.l.b16 %v222
    %v862 = vunpack.c.l.b16 %v223
    %v863 = vunpack.c.l.b16 %v224
    %v864 = vunpack.c.l.b16 %v225
    %v865 = vunpack.c.l.b16 %v226
    %v866 = vunpack.c.l.b16 %v227
    %v867 = vunpack.c.l.b16 %v228
    %v868 = vunpack.c.l.b16 %v229
    %v869 = vunpack.c.l.b16 %v230
    %v870 = vunpack.c.l.b16 %v231
    %v871 = vunpack.c.l.b16 %v232
    %v872 = vunpack.c.l.b16 %v233
    %v873 = vunpack.c.l.b16 %v234
    %v874 = vunpack.c.l.b16 %v235
    %v875 = vunpack.c.l.b16 %v236
    %v876 = vunpack.c.l.b16 %v237
    %v877 = vunpack.c.l.b16 %v238
    %v878 = vunpack.c.l.b16 %v239
    %v879 = vunpack.c.l.b16 %v240
    %v880 = vunpack.c.l.b16 %v241
    %v881 = vunpack.c.l.b16 %v242
    %v882 = vunpack.c.l.b16 %v243
    %v883 = vunpack.c.l.b16 %v244
    %v884 = vunpack.c.l.b16 %v245
    %v885 = vunpack.c.l.b16 %v246
    %v886 = vunpack.c.l.b16 %v247
    %v887 = vunpack.c.l.b16 %v248
    %v888 = vunpack.c.l.b16 %v249
    %v889 = vunpack.c.l.b16 %v250
    %v890 = vunpack.c.l.b16 %v251
    %v891 = vunpack.c.l.b16 %v252
    %v892 = vunpack.c.l.b16 %v253
    %v893 = vunpack.c.l.b16 %v254
    %v894 = vunpack.c.l.b16 %v255
    %v895 = vunpack.c.l.b16 %v256
    %v896 = vunpack.c.l.b16 %v257
    %v897 = vunpack.c.l.b16 %v258
    %v898 = vunpack.c.l.b16 %v259
    %v899 = vunpack.c.l.b16 %v260
    %v900 = vunpack.c.l.b16 %v261
    %v901 = vunpack.c.l.b16 %v262
    %v902 = vunpack.c.l.b16 %v263
    %v903 = vunpack.c.l.b16 %v264
    %v904 = vunpack.c.l.b16 %v265
    %v905 = vunpack.c.l.b16 %v266
    %v906 = vunpack.c.l.b16 %v267
    %v907 = vunpack.c.l.b16 %v268
    %v908 = vunpack.c.l.b16 %v269
    %v909 = vunpack.c.l.b16 %v270
    %v910 = vunpack.c.l.b16 %v271
    %v911 = vunpack.c.l.b16 %v272
    %v912 = vunpack.c.l.b16 %v273
    %v913 = vunpack.c.l.b16 %v274
    %v914 = vunpack.c.l.b16 %v275
    %v915 = vunpack.c.l.b16 %v276
    %v916 = vunpack.c.l.b16 %v277
    %v917 = vunpack.c.l.b16 %v278
    %v918 = vunpack.c.l.b16 %v279
    %v919 = vunpack.c.l.b16 %v280
    %v920 = vunpack.c.l.b16 %v281
    %v921 = vunpack.c.l.b16 %v282
    %v922 = vunpack.c.l.b16 %v283
    %v923 = vunpack.c.l.b16 %v284
    %v924 = vunpack.c.l.b16 %v285
    %v925 = vunpack.c.l.b16 %v286
    %v926 = vunpack.c.l.b16 %v287
    %v927 = vunpack.c.l.b16 %v288
    %v928 = vunpack.c.l.b16 %v289
    %v929 = vunpack.c.l.b16 %v290
    %v930 = vunpack.c.l.b16 %v291
    %v931 = vunpack.c.l.b16 %v292
    %v932 = vunpack.c.l.b16 %v293
    %v933 = vunpack.c.l.b16 %v294
    %v934 = vunpack.c.l.b16 %v295
    %v935 = vunpack.c.l.b16 %v296
    %v936 = vunpack.c.l.b16 %v297
    %v937 = vunpack.c.l.b16 %v298
    %v938 = vunpack.c.l.b16 %v299
    %v939 = vunpack.c.l.b16 %v300
    %v940 = vunpack.c.l.b16 %v301
    %v941 = vunpack.c.l.b16 %v302
    %v942 = vunpack.c.l.b16 %v303
    %v943 = vunpack.c.l.b16 %v304
    %v944 = vunpack.c.l.b16 %v305
    %v945 = vunpack.c.l.b16 %v306
    %v946 = vunpack.c.l.b16 %v307
    %v947 = vunpack.c.l.b16 %v308
    %v948 = vunpack.c.l.b16 %v309
    %v949 = vunpack.c.l.b16 %v310
    %v950 = vunpack.c.l.b16 %v311
    %v951 = vunpack.c.l.b16 %v312
    %v952 = vunpack.c.l.b16 %v313
    %v953 = vunpack.c.l.b16 %v314
    %v954 = vunpack.c.l.b16 %v315
    %v955 = vunpack.c.l.b16 %v316
    %v956 = vunpack.c.l.b16 %v317
    %v957 = vunpack.c.l.b16 %v318
    %v958 = vunpack.c.l.b16 %v319
    %v959 = vunpack.c.l.b16 %v320
    %v960 = vunpack.c.l.b16 %v321
    %v961 = vunpack.c.l.b16 %v322
    %v962 = vunpack.c.l.b16 %v323
    %v963 = vunpack.c.l.b16 %v324
    %v964 = vunpack.c.l.b16 %v325
    %v965 = vunpack.c.l.b16 %v326
    %v966 = vunpack.c.l.b16 %v327
    %v967 = vunpack.c.l.b16 %v328
    %v968 = vunpack.c.l.b16 %v329
    %v969 = vunpack.c.l.b16 %v330
    %v970 = vunpack.c.l.b16 %v331
    %v971 = vunpack.c.l.b16 %v332
    %v972 = vunpack.c.l.b16 %v333
    %v973 = vunpack.c.l.b16 %v334
    %v974 = vunpack.c.l.b16 %v335
    %v975 = vunpack.c.l.b16 %v336
    %v976 = vunpack.c.l.b16 %v337
    %v977 = vunpack.c.l.b16 %v338
    %v978 = vunpack.c.l.b16 %v339
    %v979 = vunpack.c.l.b16 %v340
    %v980 = vunpack.c.l.b16 %v341
    %v981 = vunpack.c.l.b16 %v342
    %v982 = vunpack.c.l.b16 %v343
    %v983 = vunpack.c.l.b16 %v344
    %v984 = vunpack.c.l.b16 %v345
    %v985 = vunpack.c.l.b16 %v346
    %v986 = vunpack.c.l.b16 %v347
    %v987 = vunpack.c.l.b16 %v348
    %v988 = vunpack.c.l.b16 %v349
    %v989 = vunpack.c.l.b16 %v350
    %v990 = vunpack.c.l.b16 %v351
    %v991 = vunpack.c.l.b16 %v352
    %v992 = vunpack.c.l.b16 %v353
    %v993 = vunpack.c.l.b16 %v354
    %v994 = vunpack.c.l.b16 %v355
    %v995 = vunpack.c.l.b16 %v356
    %v996 = vunpack.c.l.b16 %v357
    %v997 = vunpack.c.l.b16 %v358
    %v998 = vunpack.c.l.b16 %v359
    %v999 = vunpack.c.l.b16 %v360
    %v1000 = vpack.c.b16 %v713, %v712
    %v1001 = vpack.c.b16 %v715, %v714
    %v1002 = vpack.c.b16 %v717, %v716
    %v1003 = vpack.c.b16 %v719, %v718
    %v1004 = vpack.c.b16 %v721, %v720
    %v1005 = vpack.c.b16 %v723, %v722
    %v1006 = vpack.c.b16 %v725, %v724
    %v1007 = vpack.c.b16 %v727, %v726
    %v1008 = vpack.c.b16 %v729, %v728
    %v1009 = vpack.c.b16 %v731, %v730
    %v1010 = vpack.c.b16 %v733, %v732
    %v1011 = vpack.c.b16 %v735, %v734
    %v1012 = vpack.c.b16 %v737, %v736
    %v1013 = vpack.c.b16 %v739, %v738
    %v1014 = vpack.c.b16 %v741, %v740
    %v1015 = vpack.c.b16 %v743, %v742
    %v1016 = vpack.c.b16 %v745, %v744
    %v1017 = vpack.c.b16 %v747, %v746
    %v1018 = vpack.c.b16 %v749, %v748
    %v1019 = vpack.c.b16 %v751, %v750
    %v1020 = vpack.c.b16 %v753, %v752
    %v1021 = vpack.c.b16 %v755, %v754
    %v1022 = vpack.c.b16 %v757, %v756
    %v1023 = vpack.c.b16 %v759, %v758
    %v1024 = vpack.c.b16 %v761, %v760
    %v1025 = vpack.c.b16 %v763, %v762
    %v1026 = vpack.c.b16 %v765, %v764
    %v1027 = vpack.c.b16 %v767, %v766
    %v1028 = vpack.c.b16 %v769, %v768
    %v1029 = vpack.c.b16 %v771, %v770
    %v1030 = vpack.c.b16 %v773, %v772
    %v1031 = vpack.c.b16 %v775, %v774
    %v1032 = vpack.c.b16 %v777, %v776
    %v1033 = vpack.c.b16 %v779, %v778
    %v1034 = vpack.c.b16 %v781, %v780
    %v1035 = vpack.c.b16 %v783, %v782
    %v1036 = vpack.c.b16 %v785, %v784
    %v1037 = vpack.c.b16 %v787, %v786
    %v1038 = vpack.c.b16 %v789, %v788
    %v1039 = vpack.c.b16 %v791, %v790
    %v1040 = vpack.c.b16 %v793, %v792
    %v1041 = vpack.c.b16 %v795, %v794
    %v1042 = vpack.c.b16 %v797, %v796
    %v1043 = vpack.c.b16 %v799, %v798
    %v1044 = vpack.c.b16 %v801, %v800
    %v1045 = vpack.c.b16 %v803, %v802
    %v1046 = vpack.c.b16 %v805, %v804
    %v1047 = vpack.c.b16 %v807, %v806
    %v1048 = vpack.c.b16 %v809, %v808
    %v1049 = vpack.c.b16 %v811, %v810
    %v1050 = vpack.c.b16 %v813, %v812
    %v1051 = vpack.c.b16 %v815, %v814
    %v1052 = vpack.c.b16 %v817, %v816
    %v1053 = vpack.c.b16 %v819, %v818
    %v1054 = vpack.c.b16 %v821, %v820
    %v1055 = vpack.c.b16 %v823, %v822
    %v1056 = vpack.c.b16 %v825, %v824
    %v1057 = vpack.c.b16 %v827, %v826
    %v1058 = vpack.c.b16 %v829, %v828
    %v1059 = vpack.c.b16 %v831, %v830
    %v1060 = vpack.c.b16 %v833, %v832
    %v1061 = vpack.c.b16 %v835, %v834
    %v1062 = vpack.c.b16 %v837, %v836
    %v1063 = vpack.c.b16 %v839, %v838
    %v1064 = vpack.c.b16 %v841, %v840
    %v1065 = vpack.c.b16 %v843, %v842
    %v1066 = vpack.c.b16 %v845, %v844
    %v1067 = vpack.c.b16 %v847, %v846
    %v1068 = vpack.c.b16 %v849, %v848
    %v1069 = vpack.c.b16 %v851, %v850
    %v1070 = vpack.c.b16 %v853, %v852
    %v1071 = vpack.c.b16 %v855, %v854
    %v1072 = vpack.c.b16 %v857, %v856
    %v1073 = vpack.c.b16 %v859, %v858
    %v1074 = vpack.c.b16 %v861, %v860
    %v1075 = vpack.c.b16 %v863, %v862
    %v1076 = vpack.c.b16 %v865, %v864
    %v1077 = vpack.c.b16 %v867, %v866
    %v1078 = vpack.c.b16 %v869, %v868
    %v1079 = vpack.c.b16 %v871, %v870
    %v1080 = vpack.c.b16 %v873, %v872
    %v1081 = vpack.c.b16 %v875, %v874
    %v1082 = vpack.c.b16 %v877, %v876
    %v1083 = vpack.c.b16 %v879, %v878
    %v1084 = vpack.c.b16 %v881, %v880
    %v1085 = vpack.c.b16 %v883, %v882
    %v1086 = vpack.c.b16 %v885, %v884
    %v1087 = vpack.c.b16 %v887, %v886
    %v1088 = vpack.c.b16 %v889, %v888
    %v1089 = vpack.c.b16 %v891, %v890
    %v1090 = vpack.c.b16 %v893, %v892
    %v1091 = vpack.c.b16 %v895, %v894
    %v1092 = vpack.c.b16 %v897, %v896
    %v1093 = vpack.c.b16 %v899, %v898
    %v1094 = vpack.c.b16 %v901, %v900
    %v1095 = vpack.c.b16 %v903, %v902
    %v1096 = vpack.c.b16 %v905, %v904
    %v1097 = vpack.c.b16 %v907, %v906
    %v1098 = vpack.c.b16 %v909, %v908
    %v1099 = vpack.c.b16 %v911, %v910
    %v1100 = vpack.c.b16 %v913, %v912
    %v1101 = vpack.c.b16 %v915, %v914
    %v1102 = vpack.c.b16 %v917, %v916
    %v1103 = vpack.c.b16 %v919, %v918
    %v1104 = vpack.c.b16 %v921, %v920
    %v1105 = vpack.c.b16 %v923, %v922
    %v1106 = vpack.c.b16 %v925, %v924
    %v1107 = vpack.c.b16 %v927, %v926
    %v1108 = vpack.c.b16 %v929, %v928
    %v1109 = vpack.c.b16 %v931, %v930
    %v1110 = vpack.c.b16 %v933, %v932
    %v1111 = vpack.c.b16 %v935, %v934
    %v1112 = vpack.c.b16 %v937, %v936
    %v1113 = vpack.c.b16 %v939, %v938
    %v1114 = vpack.c.b16 %v941, %v940
    %v1115 = vpack.c.b16 %v943, %v942
    %v1116 = vpack.c.b16 %v945, %v944
    %v1117 = vpack.c.b16 %v947, %v946
    %v1118 = vpack.c.b16 %v949, %v948
    %v1119 = vpack.c.b16 %v951, %v950
    %v1120 = vpack.c.b16 %v953, %v952
    %v1121 = vpack.c.b16 %v955, %v954
    %v1122 = vpack.c.b16 %v957, %v956
    %v1123 = vpack.c.b16 %v959, %v958
    %v1124 = vpack.c.b16 %v961, %v960
    %v1125 = vpack.c.b16 %v963, %v962
    %v1126 = vpack.c.b16 %v965, %v964
    %v1127 = vpack.c.b16 %v967, %v966
    %v1128 = vpack.c.b16 %v969, %v968
    %v1129 = vpack.c.b16 %v971, %v970
    %v1130 = vpack.c.b16 %v973, %v972
    %v1131 = vpack.c.b16 %v975, %v974
    %v1132 = vpack.c.b16 %v977, %v976
    %v1133 = vpack.c.b16 %v979, %v978
    %v1134 = vpack.c.b16 %v981, %v980
    %v1135 = vpack.c.b16 %v983, %v982
    %v1136 = vpack.c.b16 %v985, %v984
    %v1137 = vpack.c.b16 %v987, %v986
    %v1138 = vpack.c.b16 %v989, %v988
    %v1139 = vpack.c.b16 %v991, %v990
    %v1140 = vpack.c.b16 %v993, %v992
    %v1141 = vpack.c.b16 %v995, %v994
    %v1142 = vpack.c.b16 %v997, %v996
    %v1143 = vpack.c.b16 %v999, %v998
    %1288 = vmatprep.subr.bf16.mxu0 0
    %1289 = vmatpush1.bf16.msra.mxu0 %v1000
    %1290 = vmatprep.subr.bf16.mxu0 0
    %1291 = vmatpush1.bf16.msra.mxu0 %v1001
    %1292 = vmatprep.subr.bf16.mxu0 0
    %1293 = vmatpush1.bf16.msra.mxu0 %v1002
    %1294 = vmatprep.subr.bf16.mxu0 0
    %1295 = vmatpush1.bf16.msra.mxu0 %v1003
    %1296 = vmatprep.subr.bf16.mxu0 0
    %1297 = vmatpush1.bf16.msra.mxu0 %v1004
    %1298 = vmatprep.subr.bf16.mxu0 0
    %1299 = vmatpush1.bf16.msra.mxu0 %v1005
    %1300 = vmatprep.subr.bf16.mxu0 0
    %1301 = vmatpush1.bf16.msra.mxu0 %v1006
    %1302 = vmatprep.subr.bf16.mxu0 0
    %1303 = vmatpush1.bf16.msra.mxu0 %v1007
    %1304 = vmatprep.subr.bf16.mxu0 0
    %1305 = vmatpush1.bf16.msra.mxu0 %v1008
    %1306 = vmatprep.subr.bf16.mxu0 0
    %1307 = vmatpush1.bf16.msra.mxu0 %v1009
    %1308 = vmatprep.subr.bf16.mxu0 0
    %1309 = vmatpush1.bf16.msra.mxu0 %v1010
    %1310 = vmatprep.subr.bf16.mxu0 0
    %1311 = vmatpush1.bf16.msra.mxu0 %v1011
    %1312 = vmatprep.subr.bf16.mxu0 0
    %1313 = vmatpush1.bf16.msra.mxu0 %v1012
    %1314 = vmatprep.subr.bf16.mxu0 0
    %1315 = vmatpush1.bf16.msra.mxu0 %v1013
    %1316 = vmatprep.subr.bf16.mxu0 0
    %1317 = vmatpush1.bf16.msra.mxu0 %v1014
    %1318 = vmatprep.subr.bf16.mxu0 0
    %1319 = vmatpush1.bf16.msra.mxu0 %v1015
    %1320 = vmatprep.mubr.bf16.mxu0 %v389
    %1321 = vmatmul.mubr.bf16.gmra.mrb[0].mxu0 %v388
    %v1322 = vpop.f32.mrb[0].mxu0
    %v1323 = vadd.f32 0.0, %v1322
    %v1324 = vpop.f32.mrb[0].mxu0
    %v1325 = vpop.f32.mrb[0].mxu0
    %v1326 = vpop.f32.mrb[0].mxu0
    %1327 = vdwg.mxu0
    %1328 = vmatprep.subr.bf16.mxu0 0
    %1329 = vmatpush1.bf16.msra.mxu0 %v1016
    %1330 = vmatprep.subr.bf16.mxu0 0
    %1331 = vmatpush1.bf16.msra.mxu0 %v1017
    %1332 = vmatprep.subr.bf16.mxu0 0
    %1333 = vmatpush1.bf16.msra.mxu0 %v1018
    %1334 = vmatprep.subr.bf16.mxu0 0
    %1335 = vmatpush1.bf16.msra.mxu0 %v1019
    %1336 = vmatprep.subr.bf16.mxu0 0
    %1337 = vmatpush1.bf16.msra.mxu0 %v1020
    %1338 = vmatprep.subr.bf16.mxu0 0
    %1339 = vmatpush1.bf16.msra.mxu0 %v1021
    %1340 = vmatprep.subr.bf16.mxu0 0
    %1341 = vmatpush1.bf16.msra.mxu0 %v1022
    %1342 = vmatprep.subr.bf16.mxu0 0
    %1343 = vmatpush1.bf16.msra.mxu0 %v1023
    %1344 = vmatprep.subr.bf16.mxu0 0
    %1345 = vmatpush1.bf16.msra.mxu0 %v1024
    %1346 = vmatprep.subr.bf16.mxu0 0
    %1347 = vmatpush1.bf16.msra.mxu0 %v1025
    %1348 = vmatprep.subr.bf16.mxu0 0
    %1349 = vmatpush1.bf16.msra.mxu0 %v1026
    %1350 = vmatprep.subr.bf16.mxu0 0
    %1351 = vmatpush1.bf16.msra.mxu0 %v1027
    %1352 = vmatprep.subr.bf16.mxu0 0
    %1353 = vmatpush1.bf16.msra.mxu0 %v1028
    %1354 = vmatprep.subr.bf16.mxu0 0
    %1355 = vmatpush1.bf16.msra.mxu0 %v1029
    %1356 = vmatprep.subr.bf16.mxu0 0
    %1357 = vmatpush1.bf16.msra.mxu0 %v1030
    %1358 = vmatprep.subr.bf16.mxu0 0
    %1359 = vmatpush1.bf16.msra.mxu0 %v1031
    %1360 = vmatprep.mubr.bf16.mxu0 %v391
    %1361 = vmatmul.mubr.bf16.gmra.mrb[0].mxu0 %v390
    %v1362 = vpop.f32.mrb[0].mxu0
    %v1363 = vadd.f32 %v1323, %v1362
    %v1364 = vpop.f32.mrb[0].mxu0
    %v1365 = vpop.f32.mrb[0].mxu0
    %v1366 = vpop.f32.mrb[0].mxu0
    %1367 = vdwg.mxu0
    %1368 = vmatprep.subr.bf16.mxu0 0
    %1369 = vmatpush1.bf16.msra.mxu0 %v1032
    %1370 = vmatprep.subr.bf16.mxu0 0
    %1371 = vmatpush1.bf16.msra.mxu0 %v1033
    %1372 = vmatprep.subr.bf16.mxu0 0
    %1373 = vmatpush1.bf16.msra.mxu0 %v1034
    %1374 = vmatprep.subr.bf16.mxu0 0
    %1375 = vmatpush1.bf16.msra.mxu0 %v1035
    %1376 = vmatprep.subr.bf16.mxu0 0
    %1377 = vmatpush1.bf16.msra.mxu0 %v1036
    %1378 = vmatprep.subr.bf16.mxu0 0
    %1379 = vmatpush1.bf16.msra.mxu0 %v1037
    %1380 = vmatprep.subr.bf16.mxu0 0
    %1381 = vmatpush1.bf16.msra.mxu0 %v1038
    %1382 = vmatprep.subr.bf16.mxu0 0
    %1383 = vmatpush1.bf16.msra.mxu0 %v1039
    %1384 = vmatprep.subr.bf16.mxu0 0
    %1385 = vmatpush1.bf16.msra.mxu0 %v1040
    %1386 = vmatprep.subr.bf16.mxu0 0
    %1387 = vmatpush1.bf16.msra.mxu0 %v1041
    %1388 = vmatprep.subr.bf16.mxu0 0
    %1389 = vmatpush1.bf16.msra.mxu0 %v1042
    %1390 = vmatprep.subr.bf16.mxu0 0
    %1391 = vmatpush1.bf16.msra.mxu0 %v1043
    %1392 = vmatprep.subr.bf16.mxu0 0
    %1393 = vmatpush1.bf16.msra.mxu0 %v1044
    %1394 = vmatprep.subr.bf16.mxu0 0
    %1395 = vmatpush1.bf16.msra.mxu0 %v1045
    %1396 = vmatprep.subr.bf16.mxu0 0
    %1397 = vmatpush1.bf16.msra.mxu0 %v1046
    %1398 = vmatprep.subr.bf16.mxu0 0
    %1399 = vmatpush1.bf16.msra.mxu0 %v1047
    %1400 = vmatprep.mubr.bf16.mxu0 %v393
    %1401 = vmatmul.mubr.bf16.gmra.mrb[0].mxu0 %v392
    %v1402 = vpop.f32.mrb[0].mxu0
    %v1403 = vadd.f32 %v1363, %v1402
    %v1404 = vpop.f32.mrb[0].mxu0
    %v1405 = vpop.f32.mrb[0].mxu0
    %v1406 = vpop.f32.mrb[0].mxu0
    %1407 = vdwg.mxu0
    %1408 = vmatprep.subr.bf16.mxu0 0
    %1409 = vmatpush1.bf16.msra.mxu0 %v1048
    %1410 = vmatprep.subr.bf16.mxu0 0
    %1411 = vmatpush1.bf16.msra.mxu0 %v1049
    %1412 = vmatprep.subr.bf16.mxu0 0
    %1413 = vmatpush1.bf16.msra.mxu0 %v1050
    %1414 = vmatprep.subr.bf16.mxu0 0
    %1415 = vmatpush1.bf16.msra.mxu0 %v1051
    %1416 = vmatprep.subr.bf16.mxu0 0
    %1417 = vmatpush1.bf16.msra.mxu0 %v1052
    %1418 = vmatprep.subr.bf16.mxu0 0
    %1419 = vmatpush1.bf16.msra.mxu0 %v1053
    %1420 = vmatprep.subr.bf16.mxu0 0
    %1421 = vmatpush1.bf16.msra.mxu0 %v1054
    %1422 = vmatprep.subr.bf16.mxu0 0
    %1423 = vmatpush1.bf16.msra.mxu0 %v1055
    %1424 = vmatprep.subr.bf16.mxu0 0
    %1425 = vmatpush1.bf16.msra.mxu0 %v1056
    %1426 = vmatprep.subr.bf16.mxu0 0
    %1427 = vmatpush1.bf16.msra.mxu0 %v1057
    %1428 = vmatprep.subr.bf16.mxu0 0
    %1429 = vmatpush1.bf16.msra.mxu0 %v1058
    %1430 = vmatprep.subr.bf16.mxu0 0
    %1431 = vmatpush1.bf16.msra.mxu0 %v1059
    %1432 = vmatprep.subr.bf16.mxu0 0
    %1433 = vmatpush1.bf16.msra.mxu0 %v1060
    %1434 = vmatprep.subr.bf16.mxu0 0
    %1435 = vmatpush1.bf16.msra.mxu0 %v1061
    %1436 = vmatprep.subr.bf16.mxu0 0
    %1437 = vmatpush1.bf16.msra.mxu0 %v1062
    %1438 = vmatprep.subr.bf16.mxu0 0
    %1439 = vmatpush1.bf16.msra.mxu0 %v1063
    %1440 = vmatprep.mubr.bf16.mxu0 %v395
    %1441 = vmatmul.mubr.bf16.gmra.mrb[0].mxu0 %v394
    %v1442 = vpop.f32.mrb[0].mxu0
    %v1443 = vadd.f32 %v1403, %v1442
    %v1444 = vpop.f32.mrb[0].mxu0
    %v1445 = vpop.f32.mrb[0].mxu0
    %v1446 = vpop.f32.mrb[0].mxu0
    %1447 = vdwg.mxu0
    %1448 = vmatprep.subr.bf16.mxu0 0
    %1449 = vmatpush1.bf16.msra.mxu0 %v1064
    %1450 = vmatprep.subr.bf16.mxu0 0
    %1451 = vmatpush1.bf16.msra.mxu0 %v1065
    %1452 = vmatprep.subr.bf16.mxu0 0
    %1453 = vmatpush1.bf16.msra.mxu0 %v1066
    %1454 = vmatprep.subr.bf16.mxu0 0
    %1455 = vmatpush1.bf16.msra.mxu0 %v1067
    %1456 = vmatprep.subr.bf16.mxu0 0
    %1457 = vmatpush1.bf16.msra.mxu0 %v1068
    %1458 = vmatprep.subr.bf16.mxu0 0
    %1459 = vmatpush1.bf16.msra.mxu0 %v1069
    %1460 = vmatprep.subr.bf16.mxu0 0
    %1461 = vmatpush1.bf16.msra.mxu0 %v1070
    %1462 = vmatprep.subr.bf16.mxu0 0
    %1463 = vmatpush1.bf16.msra.mxu0 %v1071
    %1464 = vmatprep.subr.bf16.mxu0 0
    %1465 = vmatpush1.bf16.msra.mxu0 %v1072
    %1466 = vmatprep.subr.bf16.mxu0 0
    %1467 = vmatpush1.bf16.msra.mxu0 %v1073
    %1468 = vmatprep.subr.bf16.mxu0 0
    %1469 = vmatpush1.bf16.msra.mxu0 %v1074
    %1470 = vmatprep.subr.bf16.mxu0 0
    %1471 = vmatpush1.bf16.msra.mxu0 %v1075
    %1472 = vmatprep.subr.bf16.mxu0 0
    %1473 = vmatpush1.bf16.msra.mxu0 %v1076
    %1474 = vmatprep.subr.bf16.mxu0 0
    %1475 = vmatpush1.bf16.msra.mxu0 %v1077
    %1476 = vmatprep.subr.bf16.mxu0 0
    %1477 = vmatpush1.bf16.msra.mxu0 %v1078
    %1478 = vmatprep.subr.bf16.mxu0 0
    %1479 = vmatpush1.bf16.msra.mxu0 %v1079
    %1480 = vmatprep.mubr.bf16.mxu0 %v397
    %1481 = vmatmul.mubr.bf16.gmra.mrb[0].mxu0 %v396
    %v1482 = vpop.f32.mrb[0].mxu0
    %v1483 = vadd.f32 %v1443, %v1482
    %v1484 = vpop.f32.mrb[0].mxu0
    %v1485 = vpop.f32.mrb[0].mxu0
    %v1486 = vpop.f32.mrb[0].mxu0
    %1487 = vdwg.mxu0
    %1488 = vmatprep.subr.bf16.mxu0 0
    %1489 = vmatpush1.bf16.msra.mxu0 %v1080
    %1490 = vmatprep.subr.bf16.mxu0 0
    %1491 = vmatpush1.bf16.msra.mxu0 %v1081
    %1492 = vmatprep.subr.bf16.mxu0 0
    %1493 = vmatpush1.bf16.msra.mxu0 %v1082
    %1494 = vmatprep.subr.bf16.mxu0 0
    %1495 = vmatpush1.bf16.msra.mxu0 %v1083
    %1496 = vmatprep.subr.bf16.mxu0 0
    %1497 = vmatpush1.bf16.msra.mxu0 %v1084
    %1498 = vmatprep.subr.bf16.mxu0 0
    %1499 = vmatpush1.bf16.msra.mxu0 %v1085
    %1500 = vmatprep.subr.bf16.mxu0 0
    %1501 = vmatpush1.bf16.msra.mxu0 %v1086
    %1502 = vmatprep.subr.bf16.mxu0 0
    %1503 = vmatpush1.bf16.msra.mxu0 %v1087
    %1504 = vmatprep.subr.bf16.mxu0 0
    %1505 = vmatpush1.bf16.msra.mxu0 %v1088
    %1506 = vmatprep.subr.bf16.mxu0 0
    %1507 = vmatpush1.bf16.msra.mxu0 %v1089
    %1508 = vmatprep.subr.bf16.mxu0 0
    %1509 = vmatpush1.bf16.msra.mxu0 %v1090
    %1510 = vmatprep.subr.bf16.mxu0 0
    %1511 = vmatpush1.bf16.msra.mxu0 %v1091
    %1512 = vmatprep.subr.bf16.mxu0 0
    %1513 = vmatpush1.bf16.msra.mxu0 %v1092
    %1514 = vmatprep.subr.bf16.mxu0 0
    %1515 = vmatpush1.bf16.msra.mxu0 %v1093
    %1516 = vmatprep.subr.bf16.mxu0 0
    %1517 = vmatpush1.bf16.msra.mxu0 %v1094
    %1518 = vmatprep.subr.bf16.mxu0 0
    %1519 = vmatpush1.bf16.msra.mxu0 %v1095
    %1520 = vmatprep.mubr.bf16.mxu0 %v399
    %1521 = vmatmul.mubr.bf16.gmra.mrb[0].mxu0 %v398
    %v1522 = vpop.f32.mrb[0].mxu0
    %v1523 = vadd.f32 %v1483, %v1522
    %v1524 = vpop.f32.mrb[0].mxu0
    %v1525 = vpop.f32.mrb[0].mxu0
    %v1526 = vpop.f32.mrb[0].mxu0
    %1527 = vdwg.mxu0
    %1528 = vmatprep.subr.bf16.mxu0 0
    %1529 = vmatpush1.bf16.msra.mxu0 %v1096
    %1530 = vmatprep.subr.bf16.mxu0 0
    %1531 = vmatpush1.bf16.msra.mxu0 %v1097
    %1532 = vmatprep.subr.bf16.mxu0 0
    %1533 = vmatpush1.bf16.msra.mxu0 %v1098
    %1534 = vmatprep.subr.bf16.mxu0 0
    %1535 = vmatpush1.bf16.msra.mxu0 %v1099
    %1536 = vmatprep.subr.bf16.mxu0 0
    %1537 = vmatpush1.bf16.msra.mxu0 %v1100
    %1538 = vmatprep.subr.bf16.mxu0 0
    %1539 = vmatpush1.bf16.msra.mxu0 %v1101
    %1540 = vmatprep.subr.bf16.mxu0 0
    %1541 = vmatpush1.bf16.msra.mxu0 %v1102
    %1542 = vmatprep.subr.bf16.mxu0 0
    %1543 = vmatpush1.bf16.msra.mxu0 %v1103
    %1544 = vmatprep.subr.bf16.mxu0 0
    %1545 = vmatpush1.bf16.msra.mxu0 %v1104
    %1546 = vmatprep.subr.bf16.mxu0 0
    %1547 = vmatpush1.bf16.msra.mxu0 %v1105
    %1548 = vmatprep.subr.bf16.mxu0 0
    %1549 = vmatpush1.bf16.msra.mxu0 %v1106
    %1550 = vmatprep.subr.bf16.mxu0 0
    %1551 = vmatpush1.bf16.msra.mxu0 %v1107
    %1552 = vmatprep.subr.bf16.mxu0 0
    %1553 = vmatpush1.bf16.msra.mxu0 %v1108
    %1554 = vmatprep.subr.bf16.mxu0 0
    %1555 = vmatpush1.bf16.msra.mxu0 %v1109
    %1556 = vmatprep.subr.bf16.mxu0 0
    %1557 = vmatpush1.bf16.msra.mxu0 %v1110
    %1558 = vmatprep.subr.bf16.mxu0 0
    %1559 = vmatpush1.bf16.msra.mxu0 %v1111
    %1560 = vmatprep.mubr.bf16.mxu0 %v401
    %1561 = vmatmul.mubr.bf16.gmra.mrb[0].mxu0 %v400
    %v1562 = vpop.f32.mrb[0].mxu0
    %v1563 = vadd.f32 %v1523, %v1562
    %v1564 = vpop.f32.mrb[0].mxu0
    %v1565 = vpop.f32.mrb[0].mxu0
    %v1566 = vpop.f32.mrb[0].mxu0
    %1567 = vdwg.mxu0
    %1568 = vmatprep.subr.bf16.mxu0 0
    %1569 = vmatpush1.bf16.msra.mxu0 %v1112
    %1570 = vmatprep.subr.bf16.mxu0 0
    %1571 = vmatpush1.bf16.msra.mxu0 %v1113
    %1572 = vmatprep.subr.bf16.mxu0 0
    %1573 = vmatpush1.bf16.msra.mxu0 %v1114
    %1574 = vmatprep.subr.bf16.mxu0 0
    %1575 = vmatpush1.bf16.msra.mxu0 %v1115
    %1576 = vmatprep.subr.bf16.mxu0 0
    %1577 = vmatpush1.bf16.msra.mxu0 %v1116
    %1578 = vmatprep.subr.bf16.mxu0 0
    %1579 = vmatpush1.bf16.msra.mxu0 %v1117
    %1580 = vmatprep.subr.bf16.mxu0 0
    %1581 = vmatpush1.bf16.msra.mxu0 %v1118
    %1582 = vmatprep.subr.bf16.mxu0 0
    %1583 = vmatpush1.bf16.msra.mxu0 %v1119
    %1584 = vmatprep.subr.bf16.mxu0 0
    %1585 = vmatpush1.bf16.msra.mxu0 %v1120
    %1586 = vmatprep.subr.bf16.mxu0 0
    %1587 = vmatpush1.bf16.msra.mxu0 %v1121
    %1588 = vmatprep.subr.bf16.mxu0 0
    %1589 = vmatpush1.bf16.msra.mxu0 %v1122
    %1590 = vmatprep.subr.bf16.mxu0 0
    %1591 = vmatpush1.bf16.msra.mxu0 %v1123
    %1592 = vmatprep.subr.bf16.mxu0 0
    %1593 = vmatpush1.bf16.msra.mxu0 %v1124
    %1594 = vmatprep.subr.bf16.mxu0 0
    %1595 = vmatpush1.bf16.msra.mxu0 %v1125
    %1596 = vmatprep.subr.bf16.mxu0 0
    %1597 = vmatpush1.bf16.msra.mxu0 %v1126
    %1598 = vmatprep.subr.bf16.mxu0 0
    %1599 = vmatpush1.bf16.msra.mxu0 %v1127
    %1600 = vmatprep.mubr.bf16.mxu0 %v403
    %1601 = vmatmul.mubr.bf16.gmra.mrb[0].mxu0 %v402
    %v1602 = vpop.f32.mrb[0].mxu0
    %v1603 = vadd.f32 %v1563, %v1602
    %v1604 = vpop.f32.mrb[0].mxu0
    %v1605 = vpop.f32.mrb[0].mxu0
    %v1606 = vpop.f32.mrb[0].mxu0
    %1607 = vdwg.mxu0
    %1608 = vmatprep.subr.bf16.mxu0 0
    %1609 = vmatpush1.bf16.msra.mxu0 %v1128
    %1610 = vmatprep.subr.bf16.mxu0 0
    %1611 = vmatpush1.bf16.msra.mxu0 %v1129
    %1612 = vmatprep.subr.bf16.mxu0 0
    %1613 = vmatpush1.bf16.msra.mxu0 %v1130
    %1614 = vmatprep.subr.bf16.mxu0 0
    %1615 = vmatpush1.bf16.msra.mxu0 %v1131
    %1616 = vmatprep.subr.bf16.mxu0 0
    %1617 = vmatpush1.bf16.msra.mxu0 %v1132
    %1618 = vmatprep.subr.bf16.mxu0 0
    %1619 = vmatpush1.bf16.msra.mxu0 %v1133
    %1620 = vmatprep.subr.bf16.mxu0 0
    %1621 = vmatpush1.bf16.msra.mxu0 %v1134
    %1622 = vmatprep.subr.bf16.mxu0 0
    %1623 = vmatpush1.bf16.msra.mxu0 %v1135
    %1624 = vmatprep.subr.bf16.mxu0 0
    %1625 = vmatpush1.bf16.msra.mxu0 %v1136
    %1626 = vmatprep.subr.bf16.mxu0 0
    %1627 = vmatpush1.bf16.msra.mxu0 %v1137
    %1628 = vmatprep.subr.bf16.mxu0 0
    %1629 = vmatpush1.bf16.msra.mxu0 %v1138
    %1630 = vmatprep.subr.bf16.mxu0 0
    %1631 = vmatpush1.bf16.msra.mxu0 %v1139
    %1632 = vmatprep.subr.bf16.mxu0 0
    %1633 = vmatpush1.bf16.msra.mxu0 %v1140
    %1634 = vmatprep.subr.bf16.mxu0 0
    %1635 = vmatpush1.bf16.msra.mxu0 %v1141
    %1636 = vmatprep.subr.bf16.mxu0 0
    %1637 = vmatpush1.bf16.msra.mxu0 %v1142
    %1638 = vmatprep.subr.bf16.mxu0 0
    %1639 = vmatpush1.bf16.msra.mxu0 %v1143
    %1640 = vmatprep.mubr.bf16.mxu0 %v405
    %1641 = vmatmul.mubr.bf16.gmra.mrb[0].mxu0 %v404
    %v1642 = vpop.f32.mrb[0].mxu0
    %v1643 = vadd.f32 %v1603, %v1642
    %v1644 = vpop.f32.mrb[0].mxu0
    %v1645 = vpop.f32.mrb[0].mxu0
    %v1646 = vpop.f32.mrb[0].mxu0
    %1647 = vdwg.mxu0
    %v1648 = vadd.f32 %v63, %v1643
    %1649 = vst [vmem:[#allocation8] sm:$0xff] %v1648
    // Predicated region
    $region34: #{tpu_custom_call.1} parent=1 // pred_check
      %p1650 = pneg %p58
    $region35: #{tpu_custom_call.1} parent=1 // pred_check_branch
      %1652 = sbr.rel (%p1650) target = $region37
    $region36: #{tpu_custom_call.1} parent=1 // pred_region
      %v1653 = vld [vmem:[#allocation8] sm:$0xff]
      %v1654 = vld [vmem:[%s3] sm:$0x1]
      %v1655 = vld [vmem:[%s3 + $0x1] sm:$0x1]
      %v1656 = vrot.slane %v1653, 4
      %v1657 = vadd.f32 %v1653, %v1656
      %v1658 = vrot.slane %v1657, 2
      %v1659 = vadd.f32 %v1657, %v1658
      %v1660 = vrot.slane %v1659, 1
      %v1661 = vadd.f32 %v1659, %v1660
      %v1662 = vrcp.pop 8.0
      %v1663 = vmul.f32 %v1661, %v1662
      %v1664 = vsub.f32 %v1653, %v1663
      %v1665 = vmul.f32 %v1664, %v1664
      %v1666 = vrot.slane %v1665, 4
      %v1667 = vadd.f32 %v1665, %v1666
      %v1668 = vrot.slane %v1667, 2
      %v1669 = vadd.f32 %v1667, %v1668
      %v1670 = vrot.slane %v1669, 1
      %v1671 = vadd.f32 %v1669, %v1670
      %v1672 = vmul.f32 %v1671, %v1662
      %v1673 = vadd.f32 %v1672, 1e-05
      %v1674 = vrsqrt.pop %v1673
      %v1675 = vmul.f32 %v1664, %v1674
      %v1676 = vlaneseq
      %v1677 = vshrl.u32 %v1676, 7
      %v1678 = vsub.s32 0, %v1677
      %v1679 = vrot.slane %v1654, %v1678
      %v1680 = vmul.f32 %v1675, %v1679
      %v1681 = vlaneseq
      %v1682 = vshrl.u32 %v1681, 7
      %v1683 = vsub.s32 0, %v1682
      %v1684 = vrot.slane %v1655, %v1683
      %v1685 = vadd.f32 %v1680, %v1684
      %vm1686 = vcmp.ge.f32.partialorder %v1685, 1.0
      %v1687 = vsel %vm1686, 1.0, 0.0
      %v1688 = vpack.c.bf16 %v1687, %v1687
      %v1689 = vld [vmem:[#allocation7] sm:$0xf]
      %v1690 = vld [vmem:[#allocation7 + $0x4] sm:$0xf]
      %v1691 = vld [vmem:[#allocation7 + $0x8] sm:$0xf]
      %v1692 = vld [vmem:[#allocation7 + $0xc] sm:$0xf]
      %v1693 = vld [vmem:[#allocation7 + $0x10] sm:$0xf]
      %v1694 = vld [vmem:[#allocation7 + $0x14] sm:$0xf]
      %v1695 = vld [vmem:[#allocation7 + $0x18] sm:$0xf]
      %v1696 = vld [vmem:[#allocation7 + $0x1c] sm:$0xf]
      %v1697 = vld [vmem:[#allocation7 + $0x20] sm:$0xf]
      %v1698 = vld [vmem:[#allocation7 + $0x24] sm:$0xf]
      %v1699 = vld [vmem:[#allocation7 + $0x28] sm:$0xf]
      %v1700 = vld [vmem:[#allocation7 + $0x2c] sm:$0xf]
      %v1701 = vld [vmem:[#allocation7 + $0x30] sm:$0xf]
      %v1702 = vld [vmem:[#allocation7 + $0x34] sm:$0xf]
      %v1703 = vld [vmem:[#allocation7 + $0x38] sm:$0xf]
      %v1704 = vld [vmem:[#allocation7 + $0x3c] sm:$0xf]
      %v1721 = vunpack.c.l.b16 %v1689
      %v1722 = vunpack.c.l.b16 %v1690
      %v1723 = vunpack.c.l.b16 %v1691
      %v1724 = vunpack.c.l.b16 %v1692
      %v1725 = vunpack.c.l.b16 %v1693
      %v1726 = vunpack.c.l.b16 %v1694
      %v1727 = vunpack.c.l.b16 %v1695
      %v1728 = vunpack.c.l.b16 %v1696
      %v1729 = vunpack.c.l.b16 %v1697
      %v1730 = vunpack.c.l.b16 %v1698
      %v1731 = vunpack.c.l.b16 %v1699
      %v1732 = vunpack.c.l.b16 %v1700
      %v1733 = vunpack.c.l.b16 %v1701
      %v1734 = vunpack.c.l.b16 %v1702
      %v1735 = vunpack.c.l.b16 %v1703
      %v1736 = vunpack.c.l.b16 %v1704
      %v1737 = vpack.c.b16 %v1722, %v1721
      %v1738 = vpack.c.b16 %v1724, %v1723
      %v1739 = vpack.c.b16 %v1726, %v1725
      %v1740 = vpack.c.b16 %v1728, %v1727
      %v1741 = vpack.c.b16 %v1730, %v1729
      %v1742 = vpack.c.b16 %v1732, %v1731
      %v1743 = vpack.c.b16 %v1734, %v1733
      %v1744 = vpack.c.b16 %v1736, %v1735
      %1753 = vmatprep.subr.bf16.mxu0 0
      %1754 = vmatpush1.bf16.msra.mxu0 %v1737
      %1755 = vmatprep.subr.bf16.mxu0 0
      %1756 = vmatpush1.bf16.msra.mxu0 %v1738
      %1757 = vmatprep.subr.bf16.mxu0 0
      %1758 = vmatpush1.bf16.msra.mxu0 %v1739
      %1759 = vmatprep.subr.bf16.mxu0 0
      %1760 = vmatpush1.bf16.msra.mxu0 %v1740
      %1761 = vmatprep.subr.bf16.mxu0 0
      %1762 = vmatpush1.bf16.msra.mxu0 %v1741
      %1763 = vmatprep.subr.bf16.mxu0 0
      %1764 = vmatpush1.bf16.msra.mxu0 %v1742
      %1765 = vmatprep.subr.bf16.mxu0 0
      %1766 = vmatpush1.bf16.msra.mxu0 %v1743
      %1767 = vmatprep.subr.bf16.mxu0 0
      %1768 = vmatpush1.bf16.msra.mxu0 %v1744
      %1769 = vmatprep.subr.bf16.mxu0 0
      %1770 = vmatpush1.bf16.msra.mxu0 0
      %1771 = vmatprep.subr.bf16.mxu0 0
      %1772 = vmatpush1.bf16.msra.mxu0 0
      %1773 = vmatprep.subr.bf16.mxu0 0
      %1774 = vmatpush1.bf16.msra.mxu0 0
      %1775 = vmatprep.subr.bf16.mxu0 0
      %1776 = vmatpush1.bf16.msra.mxu0 0
      %1777 = vmatprep.subr.bf16.mxu0 0
      %1778 = vmatpush1.bf16.msra.mxu0 0
      %1779 = vmatprep.subr.bf16.mxu0 0
      %1780 = vmatpush1.bf16.msra.mxu0 0
      %1781 = vmatprep.subr.bf16.mxu0 0
      %1782 = vmatpush1.bf16.msra.mxu0 0
      %1783 = vmatprep.subr.bf16.mxu0 0
      %1784 = vmatpush1.bf16.msra.mxu0 0
      %1785 = vmatprep.mubr.bf16.mxu0 0
      %1786 = vmatmul.mubr.bf16.gmra.mrb[0].mxu0 %v1688
      %v1787 = vpop.f32.mrb[0].mxu0
      %v1788 = vadd.f32 0.0, %v1787
      %v1789 = vpop.f32.mrb[0].mxu0
      %v1790 = vpop.f32.mrb[0].mxu0
      %v1791 = vpop.f32.mrb[0].mxu0
      %1792 = vdwg.mxu0
      %v1793 = vld [vmem:[%s3 + $0x2] sm:$0x1]
      %v1794 = vld [vmem:[%s3 + $0x3] sm:$0x1]
      %v1795 = vrot.slane %v1788, 4
      %v1796 = vadd.f32 %v1788, %v1795
      %v1797 = vrot.slane %v1796, 2
      %v1798 = vadd.f32 %v1796, %v1797
      %v1799 = vrot.slane %v1798, 1
      %v1800 = vadd.f32 %v1798, %v1799
      %v1801 = vmul.f32 %v1800, %v1662
      %v1802 = vsub.f32 %v1788, %v1801
      %v1803 = vmul.f32 %v1802, %v1802
      %v1804 = vrot.slane %v1803, 4
      %v1805 = vadd.f32 %v1803, %v1804
      %v1806 = vrot.slane %v1805, 2
      %v1807 = vadd.f32 %v1805, %v1806
      %v1808 = vrot.slane %v1807, 1
      %v1809 = vadd.f32 %v1807, %v1808
      %v1810 = vmul.f32 %v1809, %v1662
      %v1811 = vadd.f32 %v1810, 1e-05
      %v1812 = vrsqrt.pop %v1811
      %v1813 = vmul.f32 %v1802, %v1812
      %v1814 = vlaneseq
      %v1815 = vshrl.u32 %v1814, 7
      %v1816 = vsub.s32 0, %v1815
      %v1817 = vrot.slane %v1793, %v1816
      %v1818 = vmul.f32 %v1813, %v1817
      %v1819 = vlaneseq
      %v1820 = vshrl.u32 %v1819, 7
      %v1821 = vsub.s32 0, %v1820
      %v1822 = vrot.slane %v1794, %v1821
      %v1823 = vadd.f32 %v1818, %v1822
      %vm1824 = vcmp.ge.f32.partialorder %v1823, 1.0
      %v1825 = vsel %vm1824, 1.0, 0.0
      %1826 = vst [vmem:[#allocation8] sm:$0xff] %v1825
    $region37: #{tpu_custom_call.1} parent=1 // pred_fallthru
      _
    // Predicated region
    $region38: #{tpu_custom_call.1} parent=1 // pred_check
      _
    $region39: #{tpu_custom_call.1} parent=1 // pred_check_branch
      %1828 = sbr.rel (0) target = $region41
    $region40: #{tpu_custom_call.1} parent=1 // pred_region
      %s1830 = ssub.s32 128, 128
      %1831 = vsyncadd [#allocation4], %s1830
      %s1833 = sshll.u32 [#allocation8], 4
      %s1834 = int_to_ptr.vmem [resolvable:$true] %s1833
      %1836 = dma.vmem_to_hbm [thread:$0]  %s1834, 128, %s4, [#allocation4]
    $region41: #{tpu_custom_call.1} parent=1 // pred_fallthru
      _
    // Predicated region
    $region42: #{tpu_custom_call.1} parent=1 // pred_check
      _
    $region43: #{tpu_custom_call.1} parent=1 // pred_check_branch
      %1838 = sbr.rel (0) target = $region45
    $region44: #{tpu_custom_call.1} parent=1 // pred_region
      %1839 = dma.done [#allocation4], 128
    $region45: #{tpu_custom_call.1} parent=1 // pred_fallthru
      _
    %1840 = vsyncpa [#allocation3], 1
    %1841 = vsyncpa [#allocation6], 1
    %1842 = vsyncpa [#allocation4], 1

</llo_original>
